<compile_context>
chip_gen: v7x
topology: tpu7x:2x2x1
jax: 0.10.0
libtpu: 0.0.40
codegen_flags: <defaults>
</compile_context>

<pallas_src>
import math

import jax
import jax.numpy as jnp
from jax.experimental import pallas as pl
from jax.experimental.pallas import tpu as pltpu

# ---- shapes implied by the module (28x28 images; small toy batch / widths) ----
IMG_H, IMG_W = 28, 28
D = IMG_H * IMG_W          # 784 flattened data dim -> TPU lanes
HID = 32                   # encoder/decoder hidden width
M = 8                      # latent dimension
B = 16                     # toy batch
TB = 8                     # batch-tile rows per grid step (multiple of 8 sublanes)

LOG2PI = math.log(2.0 * math.pi)


def _vae_gaussian_kernel(x_ref, eps_ref, w1e_ref, w2d_ref, wh_ref, wd1_ref,
                         vecs_ref, elbo_ref, loc_ref):
    """One batch tile: encoder -> reparam sample -> GaussianDecoder -> per-example ELBO."""
    x = x_ref[...]                       # (TB, D) f32, binarized data
    eps = eps_ref[...]                   # (TB, M) f32, N(0,1) noise for rsample()

    # unpack the single packed small-vector buffer (one DMA instead of six)
    b1e = vecs_ref[0:1, :HID]            # encoder layer-1 bias        (1, HID)
    bm = vecs_ref[1:2, :M]               # encoder mean-head bias      (1, M)
    bs = vecs_ref[2:3, :M]               # encoder log-std-head bias   (1, M)
    b1d = vecs_ref[3:4, :HID]            # decoder layer-1 bias        (1, HID)
    b2d = vecs_ref[4:5, :]               # decoder output bias         (1, D)
    dec_log_std = vecs_ref[5:6, :]       # module's nn.Parameter std (pre-exp), (1, D)

    # ---- encoder: Linear(D,HID) -> ReLU -> two separate (HID, M) heads ----
    h = jnp.maximum(
        jnp.dot(x.astype(jnp.bfloat16), w1e_ref[...],
                preferred_element_type=jnp.float32) + b1e, 0.0)
    mean = jnp.dot(h, wh_ref[0], preferred_element_type=jnp.float32) + bm       # (TB, M)
    log_std = jnp.dot(h, wh_ref[1], preferred_element_type=jnp.float32) + bs    # (TB, M)

    # ---- reparameterized sample z ~ q ----
    z = mean + jnp.exp(log_std) * eps                                            # (TB, M)

    # ---- decoder_net: Linear(M,HID) -> ReLU -> Linear(HID,D) = Gaussian loc ----
    hd = jnp.maximum(
        jnp.dot(z, wd1_ref[...], preferred_element_type=jnp.float32) + b1d, 0.0)
    loc = jnp.dot(hd.astype(jnp.bfloat16), w2d_ref[...],
                  preferred_element_type=jnp.float32) + b2d                      # (TB, D)

    # ---- GaussianDecoder: Independent(Normal(loc, exp(std)), 2).log_prob(x) ----
    r = (x - loc) * jnp.exp(-dec_log_std)
    recon_lp = (-0.5 * jnp.sum(r * r, axis=-1, keepdims=True)
                - jnp.sum(dec_log_std, axis=-1, keepdims=True)
                - 0.5 * D * LOG2PI)                                              # (TB, 1)

    # ---- prior.log_prob(z) - q.log_prob(z), fused (zn == eps exactly) ----
    kl_neg = jnp.sum(0.5 * (eps * eps - z * z) + log_std,
                     axis=-1, keepdims=True)                                     # (TB, 1)

    elbo_ref[...] = recon_lp + kl_neg     # per-example ELBO; wrapper takes -mean
    loc_ref[...] = loc                    # the distribution's loc (forward() output)


def _pack_params(p):
    """Offline packing: big weights in bf16, heads stacked, all small vectors in one buffer."""
    w1e = p["w1e"].astype(jnp.bfloat16)                       # (D, HID)
    w2d = p["w2d"].astype(jnp.bfloat16)                       # (HID, D)
    wh = jnp.stack([p["w2e_mean"], p["w2e_logstd"]], axis=0)  # (2, HID, M) f32
    wd1 = p["w1d"]                                            # (M, HID)   f32
    vecs = jnp.zeros((8, D), jnp.float32)
    vecs = vecs.at[0, :HID].set(p["b1e"])
    vecs = vecs.at[1, :M].set(p["b2e_mean"])
    vecs = vecs.at[2, :M].set(p["b2e_logstd"])
    vecs = vecs.at[3, :HID].set(p["b1d"])
    vecs = vecs.at[4, :].set(p["b2d"])
    vecs = vecs.at[5, :].set(p["dec_log_std"].reshape(D))
    return w1e, w2d, wh, wd1, vecs


def vae_forward(x_img, eps, params):
    """x_img: (B, 28, 28) in {0,1}; eps: (B, M).  Returns (-ELBO, loc (B,28,28), scale (28,28))."""
    x_flat = x_img.reshape(x_img.shape[0], D)
    w1e, w2d, wh, wd1, vecs = _pack_params(params)   # done once per training step in practice
    n_tiles = x_flat.shape[0] // TB

    elbo, loc = pl.pallas_call(
        _vae_gaussian_kernel,
        out_shape=(jax.ShapeDtypeStruct((x_flat.shape[0], 1), jnp.float32),
                   jax.ShapeDtypeStruct((x_flat.shape[0], D), jnp.float32)),
        grid_spec=pltpu.PrefetchScalarGridSpec(
            num_scalar_prefetch=0,
            grid=(n_tiles,),
            in_specs=[
                pl.BlockSpec((TB, D), lambda i: (i, 0)),          # x tile
                pl.BlockSpec((TB, M), lambda i: (i, 0)),          # eps tile
                pl.BlockSpec((D, HID), lambda i: (0, 0)),         # w1e   (resident)
                pl.BlockSpec((HID, D), lambda i: (0, 0)),         # w2d   (resident)
                pl.BlockSpec((2, HID, M), lambda i: (0, 0, 0)),   # enc heads (resident)
                pl.BlockSpec((M, HID), lambda i: (0, 0)),         # dec layer 1 (resident)
                pl.BlockSpec((8, D), lambda i: (0, 0)),           # packed biases + std
            ],
            out_specs=[
                pl.BlockSpec((TB, 1), lambda i: (i, 0)),          # per-example ELBO
                pl.BlockSpec((TB, D), lambda i: (i, 0)),          # decoder loc (lane-dense)
            ]),
        compiler_params=pltpu.CompilerParams(
            dimension_semantics=("parallel",)),                    # v7x: 2 TCs split tiles
    )(x_flat, eps, w1e, w2d, wh, wd1, vecs)

    neg_elbo = -jnp.mean(elbo)
    scale = jnp.exp(params["dec_log_std"])          # GaussianDecoder's scale = exp(std)
    return neg_elbo, loc.reshape(-1, IMG_H, IMG_W), scale


def init_params(key):
    """Deterministic synthetic weights for encoder/decoder MLPs + the module's std param."""
    ks = jax.random.split(key, 5)

    def lin(k, fi, fo):
        kw, kb = jax.random.split(k)
        s = 1.0 / math.sqrt(fi)
        w = jax.random.uniform(kw, (fi, fo), jnp.float32, -s, s)
        b = jax.random.uniform(kb, (fo,), jnp.float32, -s, s)
        return w, b

    p = {}
    p["w1e"], p["b1e"] = lin(ks[0], D, HID)
    p["w2e_mean"], p["b2e_mean"] = lin(ks[1], HID, M)       # split head (no lane slice)
    p["w2e_logstd"], p["b2e_logstd"] = lin(ks[2], HID, M)
    p["w1d"], p["b1d"] = lin(ks[3], M, HID)
    p["w2d"], p["b2d"] = lin(ks[4], HID, D)
    # GaussianDecoder: self.std = nn.Parameter(torch.ones(28, 28) * 0.5)
    p["dec_log_std"] = jnp.full((IMG_H, IMG_W), 0.5, jnp.float32)
    return p


def _reference(x_flat, eps, p):
    """Pure-JAX mirror of the kernel math (same bf16 matmul precision)."""
    xb = x_flat.astype(jnp.bfloat16)
    h = jnp.maximum(jnp.dot(xb, p["w1e"].astype(jnp.bfloat16),
                            preferred_element_type=jnp.float32) + p["b1e"], 0.0)
    mean = jnp.dot(h, p["w2e_mean"], preferred_element_type=jnp.float32) + p["b2e_mean"]
    log_std = jnp.dot(h, p["w2e_logstd"], preferred_element_type=jnp.float32) + p["b2e_logstd"]
    z = mean + jnp.exp(log_std) * eps
    hd = jnp.maximum(jnp.dot(z, p["w1d"], preferred_element_type=jnp.float32) + p["b1d"], 0.0)
    loc = jnp.dot(hd.astype(jnp.bfloat16), p["w2d"].astype(jnp.bfloat16),
                  preferred_element_type=jnp.float32) + p["b2d"]
    dls = p["dec_log_std"].reshape(1, D)
    r = (x_flat - loc) * jnp.exp(-dls)
    recon = -0.5 * jnp.sum(r * r, axis=-1) - jnp.sum(dls) - 0.5 * D * LOG2PI
    kl_neg = jnp.sum(0.5 * (eps * eps - z * z) + log_std, axis=-1)
    return -jnp.mean(recon + kl_neg), loc


if __name__ == "__main__":
    key = jax.random.PRNGKey(0)
    k_x, k_eps, k_params = jax.random.split(key, 3)

    # binarized 28x28 images (what the VAE in vae_bernoulli.py consumes)
    x = (jax.random.uniform(k_x, (B, IMG_H, IMG_W)) < 0.5).astype(jnp.float32)
    # reparameterization noise (torch's q.rsample() draws this internally)
    eps = jax.random.normal(k_eps, (B, M), jnp.float32)

    params = init_params(k_params)

    neg_elbo, loc, scale = vae_forward(x, eps, params)
    jax.block_until_ready((neg_elbo, loc, scale))

    ref_neg_elbo, ref_loc = _reference(x.reshape(B, D), eps, params)
    assert jnp.allclose(neg_elbo, ref_neg_elbo, rtol=5e-3, atol=0.5), (neg_elbo, ref_neg_elbo)
    assert jnp.allclose(loc.reshape(B, D), ref_loc, rtol=5e-3, atol=5e-3), "loc mismatch"

    print("KERNEL_OK")
</pallas_src>

<mosaic_0001>
module attributes {stable_mosaic.version = 11 : i64} {
  func.func @_vae_gaussian_kernel(%arg0: i32, %arg1: memref<8x784xf32, #tpu.memory_space<vmem>>, %arg2: memref<8x8xf32, #tpu.memory_space<vmem>>, %arg3: memref<784x32xbf16, #tpu.memory_space<vmem>>, %arg4: memref<32x784xbf16, #tpu.memory_space<vmem>>, %arg5: memref<2x32x8xf32, #tpu.memory_space<vmem>>, %arg6: memref<8x32xf32, #tpu.memory_space<vmem>>, %arg7: memref<8x784xf32, #tpu.memory_space<vmem>>, %arg8: memref<8x1xf32, #tpu.memory_space<vmem>>, %arg9: memref<8x784xf32, #tpu.memory_space<vmem>>) attributes {dimension_semantics = [#tpu.dimension_semantics<parallel>], iteration_bounds = array<i64: 2>, scalar_prefetch = 0 : i64, scratch_operands = 0 : i64, tpu.core_type = #tpu.core_type<tc>, window_params = [{transform_indices = @transform_0, window_bounds = array<i64: 8, 784>}, {transform_indices = @transform_1, window_bounds = array<i64: 8, 8>}, {pipeline_mode = #tpu.pipeline_mode<synchronous>, transform_indices = @transform_2, window_bounds = array<i64: 784, 32>}, {pipeline_mode = #tpu.pipeline_mode<synchronous>, transform_indices = @transform_3, window_bounds = array<i64: 32, 784>}, {pipeline_mode = #tpu.pipeline_mode<synchronous>, transform_indices = @transform_4, window_bounds = array<i64: 2, 32, 8>}, {pipeline_mode = #tpu.pipeline_mode<synchronous>, transform_indices = @transform_5, window_bounds = array<i64: 8, 32>}, {pipeline_mode = #tpu.pipeline_mode<synchronous>, transform_indices = @transform_6, window_bounds = array<i64: 8, 784>}, {transform_indices = @transform_7, window_bounds = array<i64: 8, 1>}, {transform_indices = @transform_8, window_bounds = array<i64: 8, 784>}]} {
    %c0 = arith.constant 0 : index
    %c0_0 = arith.constant 0 : index
    %0 = vector.load %arg1[%c0, %c0_0] : memref<8x784xf32, #tpu.memory_space<vmem>>, vector<8x784xf32>
    %c0_1 = arith.constant 0 : index
    %c0_2 = arith.constant 0 : index
    %1 = vector.load %arg2[%c0_1, %c0_2] : memref<8x8xf32, #tpu.memory_space<vmem>>, vector<8x8xf32>
    %c0_3 = arith.constant 0 : index
    %c0_4 = arith.constant 0 : index
    %2 = vector.load %arg7[%c0_3, %c0_4] : memref<8x784xf32, #tpu.memory_space<vmem>>, vector<1x32xf32>
    %c1 = arith.constant 1 : index
    %c0_5 = arith.constant 0 : index
    %3 = vector.load %arg7[%c1, %c0_5] : memref<8x784xf32, #tpu.memory_space<vmem>>, vector<1x8xf32>
    %c2 = arith.constant 2 : index
    %c0_6 = arith.constant 0 : index
    %4 = vector.load %arg7[%c2, %c0_6] : memref<8x784xf32, #tpu.memory_space<vmem>>, vector<1x8xf32>
    %c3 = arith.constant 3 : index
    %c0_7 = arith.constant 0 : index
    %5 = vector.load %arg7[%c3, %c0_7] : memref<8x784xf32, #tpu.memory_space<vmem>>, vector<1x32xf32>
    %c4 = arith.constant 4 : index
    %c0_8 = arith.constant 0 : index
    %6 = vector.load %arg7[%c4, %c0_8] : memref<8x784xf32, #tpu.memory_space<vmem>>, vector<1x784xf32>
    %c5 = arith.constant 5 : index
    %c0_9 = arith.constant 0 : index
    %7 = vector.load %arg7[%c5, %c0_9] : memref<8x784xf32, #tpu.memory_space<vmem>>, vector<1x784xf32>
    %8 = arith.truncf %0 : vector<8x784xf32> to vector<8x784xbf16>
    %c0_10 = arith.constant 0 : index
    %c0_11 = arith.constant 0 : index
    %9 = vector.load %arg3[%c0_10, %c0_11] : memref<784x32xbf16, #tpu.memory_space<vmem>>, vector<784x32xbf16>
    %cst = arith.constant dense<0.000000e+00> : vector<8x32xf32>
    %10 = tpu.matmul %8, %9, %cst {dimension_numbers = #tpu.dot_dimension_numbers<[1], [0], [0], [1], [0, 0, 1, 1], [], []>} : vector<8x784xbf16>, vector<784x32xbf16>, vector<8x32xf32> -> vector<8x32xf32>
    %11 = vector.broadcast %2 : vector<1x32xf32> to vector<8x32xf32>
    %12 = arith.addf %10, %11 : vector<8x32xf32>
    %cst_12 = arith.constant 0.000000e+00 : f32
    %13 = vector.broadcast %cst_12 : f32 to vector<8x32xf32>
    %14 = arith.maximumf %12, %13 : vector<8x32xf32>
    %c0_13 = arith.constant 0 : index
    %c0_14 = arith.constant 0 : index
    %c0_15 = arith.constant 0 : index
    %15 = vector.load %arg5[%c0_13, %c0_14, %c0_15] : memref<2x32x8xf32, #tpu.memory_space<vmem>>, vector<1x32x8xf32>
    %16 = vector.shape_cast %15 : vector<1x32x8xf32> to vector<32x8xf32>
    %cst_16 = arith.constant dense<0.000000e+00> : vector<8x8xf32>
    %17 = tpu.matmul %14, %16, %cst_16 {dimension_numbers = #tpu.dot_dimension_numbers<[1], [0], [0], [1], [0, 0, 1, 1], [], []>} : vector<8x32xf32>, vector<32x8xf32>, vector<8x8xf32> -> vector<8x8xf32>
    %18 = vector.broadcast %3 : vector<1x8xf32> to vector<8x8xf32>
    %19 = arith.addf %17, %18 : vector<8x8xf32>
    %c1_17 = arith.constant 1 : index
    %c0_18 = arith.constant 0 : index
    %c0_19 = arith.constant 0 : index
    %20 = vector.load %arg5[%c1_17, %c0_18, %c0_19] : memref<2x32x8xf32, #tpu.memory_space<vmem>>, vector<1x32x8xf32>
    %21 = vector.shape_cast %20 : vector<1x32x8xf32> to vector<32x8xf32>
    %cst_20 = arith.constant dense<0.000000e+00> : vector<8x8xf32>
    %22 = tpu.matmul %14, %21, %cst_20 {dimension_numbers = #tpu.dot_dimension_numbers<[1], [0], [0], [1], [0, 0, 1, 1], [], []>} : vector<8x32xf32>, vector<32x8xf32>, vector<8x8xf32> -> vector<8x8xf32>
    %23 = vector.broadcast %4 : vector<1x8xf32> to vector<8x8xf32>
    %24 = arith.addf %22, %23 : vector<8x8xf32>
    %25 = math.exp %24 : vector<8x8xf32>
    %26 = arith.mulf %25, %1 : vector<8x8xf32>
    %27 = arith.addf %19, %26 : vector<8x8xf32>
    %c0_21 = arith.constant 0 : index
    %c0_22 = arith.constant 0 : index
    %28 = vector.load %arg6[%c0_21, %c0_22] : memref<8x32xf32, #tpu.memory_space<vmem>>, vector<8x32xf32>
    %cst_23 = arith.constant dense<0.000000e+00> : vector<8x32xf32>
    %29 = tpu.matmul %27, %28, %cst_23 {dimension_numbers = #tpu.dot_dimension_numbers<[1], [0], [0], [1], [0, 0, 1, 1], [], []>} : vector<8x8xf32>, vector<8x32xf32>, vector<8x32xf32> -> vector<8x32xf32>
    %30 = vector.broadcast %5 : vector<1x32xf32> to vector<8x32xf32>
    %31 = arith.addf %29, %30 : vector<8x32xf32>
    %cst_24 = arith.constant 0.000000e+00 : f32
    %32 = vector.broadcast %cst_24 : f32 to vector<8x32xf32>
    %33 = arith.maximumf %31, %32 : vector<8x32xf32>
    %34 = arith.truncf %33 : vector<8x32xf32> to vector<8x32xbf16>
    %c0_25 = arith.constant 0 : index
    %c0_26 = arith.constant 0 : index
    %35 = vector.load %arg4[%c0_25, %c0_26] : memref<32x784xbf16, #tpu.memory_space<vmem>>, vector<32x784xbf16>
    %cst_27 = arith.constant dense<0.000000e+00> : vector<8x784xf32>
    %36 = tpu.matmul %34, %35, %cst_27 {dimension_numbers = #tpu.dot_dimension_numbers<[1], [0], [0], [1], [0, 0, 1, 1], [], []>} : vector<8x32xbf16>, vector<32x784xbf16>, vector<8x784xf32> -> vector<8x784xf32>
    %37 = vector.broadcast %6 : vector<1x784xf32> to vector<8x784xf32>
    %38 = arith.addf %36, %37 : vector<8x784xf32>
    %39 = arith.subf %0, %38 : vector<8x784xf32>
    %cst_28 = arith.constant 0.000000e+00 : f32
    %40 = vector.broadcast %cst_28 : f32 to vector<1x784xf32>
    %41 = arith.subf %40, %7 : vector<1x784xf32>
    %42 = math.exp %41 : vector<1x784xf32>
    %43 = vector.broadcast %42 : vector<1x784xf32> to vector<8x784xf32>
    %44 = arith.mulf %39, %43 : vector<8x784xf32>
    %45 = arith.mulf %44, %44 : vector<8x784xf32>
    %cst_29 = arith.constant dense<0.000000e+00> : vector<8xf32>
    %46 = vector.multi_reduction <add>, %45, %cst_29 [1] : vector<8x784xf32> to vector<8xf32>
    %47 = vector.shape_cast %46 : vector<8xf32> to vector<8x1xf32>
    %cst_30 = arith.constant -5.000000e-01 : f32
    %48 = vector.broadcast %cst_30 : f32 to vector<8x1xf32>
    %49 = arith.mulf %48, %47 : vector<8x1xf32>
    %cst_31 = arith.constant dense<0.000000e+00> : vector<1xf32>
    %50 = vector.multi_reduction <add>, %7, %cst_31 [1] : vector<1x784xf32> to vector<1xf32>
    %51 = vector.shape_cast %50 : vector<1xf32> to vector<1x1xf32>
    %52 = vector.broadcast %51 : vector<1x1xf32> to vector<8x1xf32>
    %53 = arith.subf %49, %52 : vector<8x1xf32>
    %cst_32 = arith.constant 720.447815 : f32
    %54 = vector.broadcast %cst_32 : f32 to vector<8x1xf32>
    %55 = arith.subf %53, %54 : vector<8x1xf32>
    %56 = arith.mulf %1, %1 : vector<8x8xf32>
    %57 = arith.mulf %27, %27 : vector<8x8xf32>
    %58 = arith.subf %56, %57 : vector<8x8xf32>
    %cst_33 = arith.constant 5.000000e-01 : f32
    %59 = vector.broadcast %cst_33 : f32 to vector<8x8xf32>
    %60 = arith.mulf %59, %58 : vector<8x8xf32>
    %61 = arith.addf %60, %24 : vector<8x8xf32>
    %cst_34 = arith.constant dense<0.000000e+00> : vector<8xf32>
    %62 = vector.multi_reduction <add>, %61, %cst_34 [1] : vector<8x8xf32> to vector<8xf32>
    %63 = vector.shape_cast %62 : vector<8xf32> to vector<8x1xf32>
    %64 = arith.addf %55, %63 : vector<8x1xf32>
    %c0_35 = arith.constant 0 : index
    %c0_36 = arith.constant 0 : index
    %65 = vector.load %arg8[%c0_35, %c0_36] : memref<8x1xf32, #tpu.memory_space<vmem>>, vector<8x1xf32>
    tpu.vector_store %arg8[%c0_35, %c0_36], %64 {strides = array<i32>} : memref<8x1xf32, #tpu.memory_space<vmem>>, vector<8x1xf32>,
    %c0_37 = arith.constant 0 : index
    %c0_38 = arith.constant 0 : index
    %66 = vector.load %arg9[%c0_37, %c0_38] : memref<8x784xf32, #tpu.memory_space<vmem>>, vector<8x784xf32>
    tpu.vector_store %arg9[%c0_37, %c0_38], %38 {strides = array<i32>} : memref<8x784xf32, #tpu.memory_space<vmem>>, vector<8x784xf32>,
    return
  }
  func.func @transform_0(%arg0: i32) -> (i32, i32) {
    %c0_i32 = arith.constant 0 : i32
    %c0_i32_0 = arith.constant 0 : i32
    return %arg0, %c0_i32 : i32, i32
  }
  func.func @transform_1(%arg0: i32) -> (i32, i32) {
    %c0_i32 = arith.constant 0 : i32
    %c0_i32_0 = arith.constant 0 : i32
    return %arg0, %c0_i32 : i32, i32
  }
  func.func @transform_2(%arg0: i32) -> (i32, i32) {
    %c0_i32 = arith.constant 0 : i32
    %c0_i32_0 = arith.constant 0 : i32
    %c0_i32_1 = arith.constant 0 : i32
    return %c0_i32, %c0_i32_0 : i32, i32
  }
  func.func @transform_3(%arg0: i32) -> (i32, i32) {
    %c0_i32 = arith.constant 0 : i32
    %c0_i32_0 = arith.constant 0 : i32
    %c0_i32_1 = arith.constant 0 : i32
    return %c0_i32, %c0_i32_0 : i32, i32
  }
  func.func @transform_4(%arg0: i32) -> (i32, i32, i32) {
    %c0_i32 = arith.constant 0 : i32
    %c0_i32_0 = arith.constant 0 : i32
    %c0_i32_1 = arith.constant 0 : i32
    %c0_i32_2 = arith.constant 0 : i32
    return %c0_i32, %c0_i32_0, %c0_i32_1 : i32, i32, i32
  }
  func.func @transform_5(%arg0: i32) -> (i32, i32) {
    %c0_i32 = arith.constant 0 : i32
    %c0_i32_0 = arith.constant 0 : i32
    %c0_i32_1 = arith.constant 0 : i32
    return %c0_i32, %c0_i32_0 : i32, i32
  }
  func.func @transform_6(%arg0: i32) -> (i32, i32) {
    %c0_i32 = arith.constant 0 : i32
    %c0_i32_0 = arith.constant 0 : i32
    %c0_i32_1 = arith.constant 0 : i32
    return %c0_i32, %c0_i32_0 : i32, i32
  }
  func.func @transform_7(%arg0: i32) -> (i32, i32) {
    %c0_i32 = arith.constant 0 : i32
    %c0_i32_0 = arith.constant 0 : i32
    return %arg0, %c0_i32 : i32, i32
  }
  func.func @transform_8(%arg0: i32) -> (i32, i32) {
    %c0_i32 = arith.constant 0 : i32
    %c0_i32_0 = arith.constant 0 : i32
    return %arg0, %c0_i32 : i32, i32
  }
}

</mosaic_0001>

<llo_original>
// kernel: tpu_custom_call.1
$region0: #{tpu_custom_call.1}
  #allocation0 [shape = 'u32[]', space=smem, size = 0x4, offset = 0x4, fixed_abs, tag = 'smem constant byte address 0x4 - core index']
  #allocation1 [shape = 'u32[144,128]{1,0:T(1,128)}', space=vmem, size = 0x12000, scoped, tag = 'internal scratch']
  %s0 = inlined_call_operand.vmem [shape: f32[16,784], index: 0, kind: input, shape index: {}]
  %s1 = inlined_call_operand.vmem [shape: f32[16,8], index: 1, kind: input, shape index: {}]
  %s2 = inlined_call_operand.vmem [shape: bf16[784,32], index: 2, kind: input, shape index: {}]
  %s3 = inlined_call_operand.vmem [shape: bf16[32,784], index: 3, kind: input, shape index: {}]
  %s4 = inlined_call_operand.vmem [shape: f32[2,32,8], index: 4, kind: input, shape index: {}]
  %s5 = inlined_call_operand.vmem [shape: f32[8,32], index: 5, kind: input, shape index: {}]
  %s6 = inlined_call_operand.vmem [shape: f32[8,784], index: 6, kind: input, shape index: {}]
  %s7 = inlined_call_operand.vmem [shape: f32[16,1], index: 7, kind: output, shape index: {0}]
  %s8 = inlined_call_operand.hbm [shape: f32[16,784], index: 8, kind: output, shape index: {1}]
  %9 = xla_tuple %s7, %s8
  %s10 = sld [smem:[#allocation0]]
  $region69: #{tpu_custom_call.1} parent=0
    _
  %s12 = ssub.s32 1, %s10
  %s13 = scalar_select 0, %s12, %s10
  $region1: #{tpu_custom_call.1} parent=0
    #allocation2 [shape = 'u8[57344]{0}', space=vmem, size = 0xe000, scoped, tag = 'output window, operand 1']
    #allocation3 [shape = 's32[2]{0}', space=sflag, size = 0x8, scoped, tag = 'scoped memory for tpu_custom_call.1']
    %14 = vsyncpa [#allocation3], 0
    %s15 = scalar_lea.sflag [#allocation3], 1
    %16 = vsyncpa %s15, 0
    loop: start=0, step=1, limit=4
    $region2: #{tpu_custom_call.1} parent=1 // loop_pre_header
      _
    $region3: #{tpu_custom_call.1} parent=1 // loop_header
      %s18 = sphi 0, %s22
      %p19 = scmp.ge.s32.totalorder %s18, 4
      %s28 = sphi 0, %s30
      %s31 = sphi 0, %s28
      %s32 = sphi 0, %s31
      %s48 = sphi 0, %s32
      %s54 = sphi 0, %s56
      %s57 = sphi 0, %s54
      %s58 = sphi 0, %s57
      %s74 = sphi 0, %s58
      %s78 = sphi 0, %s78
      %s80 = sphi 0, %s78
      %s81 = sphi 0, %s80
      %s95 = sphi 0, %s81
      %s99 = sphi 0, %s99
      %s101 = sphi 0, %s99
      %s102 = sphi 0, %s101
      %s116 = sphi 0, %s102
      %s120 = sphi 0, %s120
      %s122 = sphi 0, %s120
      %s123 = sphi 0, %s122
      %s137 = sphi 0, %s123
      %s141 = sphi 0, %s141
      %s143 = sphi 0, %s141
      %s144 = sphi 0, %s143
      %s158 = sphi 0, %s144
      %s162 = sphi 0, %s162
      %s164 = sphi 0, %s162
      %s165 = sphi 0, %s164
      %s179 = sphi 0, %s165
      %s185 = sphi 0, %s187
      %s188 = sphi 0, %s185
      %s189 = sphi 0, %s188
      %s205 = sphi 0, %s189
      %s211 = sphi 0, %s213
      %s214 = sphi 0, %s211
      %s215 = sphi 0, %s214
      %s231 = sphi 0, %s215
    $region4: #{tpu_custom_call.1} parent=1 // loop_header_branch
      %21 = sbr.rel (%p19) target = $region8
    $region5: #{tpu_custom_call.1} parent=1 // loop_body
      %s23 = ssub.s32 %s18, 1
      %s24 = ssub.s32 %s18, 2
      %s25 = sadd.s32 %s18, 1
      %s26 = ssub.s32 %s18, %s25
      %p27 = scmp.eq.s32.totalorder %s26, 0
      %s29 = sadd.s32 %s28, 1
      %s30 = scalar_select %p27, %s28, %s29
      %p33 = pneg %p27
      %p34 = scmp.eq.s32.totalorder %s18, 1
      %p35 = por %p33, %p34
      %p36 = scmp.ne.s32.totalorder %s28, %s31
      %p37 = scmp.eq.s32.totalorder %s18, 0
      %p38 = por %p36, %p37
      %p39 = scmp.ne.s32.totalorder %s28, %s31
      %p40 = scmp.eq.s32.totalorder %s23, 1
      %p41 = por %p39, %p40
      %p42 = scmp.ne.s32.totalorder %s31, %s32
      %p43 = scmp.eq.s32.totalorder %s23, 0
      %p44 = por %p42, %p43
      %p45 = scmp.ne.s32.totalorder %s31, %s32
      %p46 = scmp.eq.s32.totalorder %s24, 1
      %p47 = por %p45, %p46
      %p49 = scmp.ne.s32.totalorder %s32, %s48
      %p50 = scmp.eq.s32.totalorder %s24, 0
      %p51 = por %p49, %p50
      %s52 = ssub.s32 %s18, %s25
      %p53 = scmp.eq.s32.totalorder %s52, 0
      %s55 = sadd.s32 %s54, 1
      %s56 = scalar_select %p53, %s54, %s55
      %p59 = pneg %p53
      %p60 = scmp.eq.s32.totalorder %s18, 1
      %p61 = por %p59, %p60
      %p62 = scmp.ne.s32.totalorder %s54, %s57
      %p63 = scmp.eq.s32.totalorder %s18, 0
      %p64 = por %p62, %p63
      %p65 = scmp.ne.s32.totalorder %s54, %s57
      %p66 = scmp.eq.s32.totalorder %s23, 1
      %p67 = por %p65, %p66
      %p68 = scmp.ne.s32.totalorder %s57, %s58
      %p69 = scmp.eq.s32.totalorder %s23, 0
      %p70 = por %p68, %p69
      %p71 = scmp.ne.s32.totalorder %s57, %s58
      %p72 = scmp.eq.s32.totalorder %s24, 1
      %p73 = por %p71, %p72
      %p75 = scmp.ne.s32.totalorder %s58, %s74
      %p76 = scmp.eq.s32.totalorder %s24, 0
      %p77 = por %p75, %p76
      %s79 = sadd.s32 %s78, 1
      %p82 = scmp.eq.s32.totalorder %s18, 1
      %p83 = scmp.ne.s32.totalorder %s78, %s80
      %p84 = scmp.eq.s32.totalorder %s18, 0
      %p85 = por %p83, %p84
      %p86 = scmp.ne.s32.totalorder %s78, %s80
      %p87 = scmp.eq.s32.totalorder %s23, 1
      %p88 = por %p86, %p87
      %p89 = scmp.ne.s32.totalorder %s80, %s81
      %p90 = scmp.eq.s32.totalorder %s23, 0
      %p91 = por %p89, %p90
      %p92 = scmp.ne.s32.totalorder %s80, %s81
      %p93 = scmp.eq.s32.totalorder %s24, 1
      %p94 = por %p92, %p93
      %p96 = scmp.ne.s32.totalorder %s81, %s95
      %p97 = scmp.eq.s32.totalorder %s24, 0
      %p98 = por %p96, %p97
      %s100 = sadd.s32 %s99, 1
      %p103 = scmp.eq.s32.totalorder %s18, 1
      %p104 = scmp.ne.s32.totalorder %s99, %s101
      %p105 = scmp.eq.s32.totalorder %s18, 0
      %p106 = por %p104, %p105
      %p107 = scmp.ne.s32.totalorder %s99, %s101
      %p108 = scmp.eq.s32.totalorder %s23, 1
      %p109 = por %p107, %p108
      %p110 = scmp.ne.s32.totalorder %s101, %s102
      %p111 = scmp.eq.s32.totalorder %s23, 0
      %p112 = por %p110, %p111
      %p113 = scmp.ne.s32.totalorder %s101, %s102
      %p114 = scmp.eq.s32.totalorder %s24, 1
      %p115 = por %p113, %p114
      %p117 = scmp.ne.s32.totalorder %s102, %s116
      %p118 = scmp.eq.s32.totalorder %s24, 0
      %p119 = por %p117, %p118
      %s121 = sadd.s32 %s120, 1
      %p124 = scmp.eq.s32.totalorder %s18, 1
      %p125 = scmp.ne.s32.totalorder %s120, %s122
      %p126 = scmp.eq.s32.totalorder %s18, 0
      %p127 = por %p125, %p126
      %p128 = scmp.ne.s32.totalorder %s120, %s122
      %p129 = scmp.eq.s32.totalorder %s23, 1
      %p130 = por %p128, %p129
      %p131 = scmp.ne.s32.totalorder %s122, %s123
      %p132 = scmp.eq.s32.totalorder %s23, 0
      %p133 = por %p131, %p132
      %p134 = scmp.ne.s32.totalorder %s122, %s123
      %p135 = scmp.eq.s32.totalorder %s24, 1
      %p136 = por %p134, %p135
      %p138 = scmp.ne.s32.totalorder %s123, %s137
      %p139 = scmp.eq.s32.totalorder %s24, 0
      %p140 = por %p138, %p139
      %s142 = sadd.s32 %s141, 1
      %p145 = scmp.eq.s32.totalorder %s18, 1
      %p146 = scmp.ne.s32.totalorder %s141, %s143
      %p147 = scmp.eq.s32.totalorder %s18, 0
      %p148 = por %p146, %p147
      %p149 = scmp.ne.s32.totalorder %s141, %s143
      %p150 = scmp.eq.s32.totalorder %s23, 1
      %p151 = por %p149, %p150
      %p152 = scmp.ne.s32.totalorder %s143, %s144
      %p153 = scmp.eq.s32.totalorder %s23, 0
      %p154 = por %p152, %p153
      %p155 = scmp.ne.s32.totalorder %s143, %s144
      %p156 = scmp.eq.s32.totalorder %s24, 1
      %p157 = por %p155, %p156
      %p159 = scmp.ne.s32.totalorder %s144, %s158
      %p160 = scmp.eq.s32.totalorder %s24, 0
      %p161 = por %p159, %p160
      %s163 = sadd.s32 %s162, 1
      %p166 = scmp.eq.s32.totalorder %s18, 1
      %p167 = scmp.ne.s32.totalorder %s162, %s164
      %p168 = scmp.eq.s32.totalorder %s18, 0
      %p169 = por %p167, %p168
      %p170 = scmp.ne.s32.totalorder %s162, %s164
      %p171 = scmp.eq.s32.totalorder %s23, 1
      %p172 = por %p170, %p171
      %p173 = scmp.ne.s32.totalorder %s164, %s165
      %p174 = scmp.eq.s32.totalorder %s23, 0
      %p175 = por %p173, %p174
      %p176 = scmp.ne.s32.totalorder %s164, %s165
      %p177 = scmp.eq.s32.totalorder %s24, 1
      %p178 = por %p176, %p177
      %p180 = scmp.ne.s32.totalorder %s165, %s179
      %p181 = scmp.eq.s32.totalorder %s24, 0
      %p182 = por %p180, %p181
      %s183 = ssub.s32 %s18, %s25
      %p184 = scmp.eq.s32.totalorder %s183, 0
      %s186 = sadd.s32 %s185, 1
      %s187 = scalar_select %p184, %s185, %s186
      %p190 = pneg %p184
      %p191 = scmp.eq.s32.totalorder %s18, 1
      %p192 = por %p190, %p191
      %p193 = scmp.ne.s32.totalorder %s185, %s188
      %p194 = scmp.eq.s32.totalorder %s18, 0
      %p195 = por %p193, %p194
      %p196 = scmp.ne.s32.totalorder %s185, %s188
      %p197 = scmp.eq.s32.totalorder %s23, 1
      %p198 = por %p196, %p197
      %p199 = scmp.ne.s32.totalorder %s188, %s189
      %p200 = scmp.eq.s32.totalorder %s23, 0
      %p201 = por %p199, %p200
      %p202 = scmp.ne.s32.totalorder %s188, %s189
      %p203 = scmp.eq.s32.totalorder %s24, 1
      %p204 = por %p202, %p203
      %p206 = scmp.ne.s32.totalorder %s189, %s205
      %p207 = scmp.eq.s32.totalorder %s24, 0
      %p208 = por %p206, %p207
      %s209 = ssub.s32 %s18, %s25
      %p210 = scmp.eq.s32.totalorder %s209, 0
      %s212 = sadd.s32 %s211, 1
      %s213 = scalar_select %p210, %s211, %s212
      %p216 = pneg %p210
      %p217 = scmp.eq.s32.totalorder %s18, 1
      %p218 = por %p216, %p217
      %p219 = scmp.ne.s32.totalorder %s211, %s214
      %p220 = scmp.eq.s32.totalorder %s18, 0
      %p221 = por %p219, %p220
      %p222 = scmp.ne.s32.totalorder %s211, %s214
      %p223 = scmp.eq.s32.totalorder %s23, 1
      %p224 = por %p222, %p223
      %p225 = scmp.ne.s32.totalorder %s214, %s215
      %p226 = scmp.eq.s32.totalorder %s23, 0
      %p227 = por %p225, %p226
      %p228 = scmp.ne.s32.totalorder %s214, %s215
      %p229 = scmp.eq.s32.totalorder %s24, 1
      %p230 = por %p228, %p229
      %p232 = scmp.ne.s32.totalorder %s215, %s231
      %p233 = scmp.eq.s32.totalorder %s24, 0
      %p234 = por %p232, %p233
      %p235 = scmp.le.s32.totalorder 1, %s18
      %p236 = scmp.lt.s32.totalorder %s18, 3
      %p237 = pnand %p235, %p236
      %p238 = pneg %p237
      // Predicated region
      $region9: #{tpu_custom_call.1} parent=5 // pred_check
        _
      $region10: #{tpu_custom_call.1} parent=5 // pred_check_branch
        %240 = sbr.rel (%p237) target = $region12
      $region11: #{tpu_custom_call.1} parent=5 // pred_region
        %s241 = ssub.s32 %s18, 1
        // Predicated region
        $region13: #{tpu_custom_call.1} parent=11 // pred_check
          %p242 = pneg %p91
        $region14: #{tpu_custom_call.1} parent=11 // pred_check_branch
          %244 = sbr.rel (%p242) target = $region16
        $region15: #{tpu_custom_call.1} parent=11 // pred_region
          _
        $region16: #{tpu_custom_call.1} parent=11 // pred_fallthru
          _
        // Predicated region
        $region17: #{tpu_custom_call.1} parent=11 // pred_check
          %p245 = pneg %p112
        $region18: #{tpu_custom_call.1} parent=11 // pred_check_branch
          %247 = sbr.rel (%p245) target = $region20
        $region19: #{tpu_custom_call.1} parent=11 // pred_region
          _
        $region20: #{tpu_custom_call.1} parent=11 // pred_fallthru
          _
        // Predicated region
        $region21: #{tpu_custom_call.1} parent=11 // pred_check
          %p248 = pneg %p133
        $region22: #{tpu_custom_call.1} parent=11 // pred_check_branch
          %250 = sbr.rel (%p248) target = $region24
        $region23: #{tpu_custom_call.1} parent=11 // pred_region
          _
        $region24: #{tpu_custom_call.1} parent=11 // pred_fallthru
          _
        // Predicated region
        $region25: #{tpu_custom_call.1} parent=11 // pred_check
          %p251 = pneg %p154
        $region26: #{tpu_custom_call.1} parent=11 // pred_check_branch
          %253 = sbr.rel (%p251) target = $region28
        $region27: #{tpu_custom_call.1} parent=11 // pred_region
          _
        $region28: #{tpu_custom_call.1} parent=11 // pred_fallthru
          _
        // Predicated region
        $region29: #{tpu_custom_call.1} parent=11 // pred_check
          %p254 = pneg %p175
        $region30: #{tpu_custom_call.1} parent=11 // pred_check_branch
          %256 = sbr.rel (%p254) target = $region32
        $region31: #{tpu_custom_call.1} parent=11 // pred_region
          _
        $region32: #{tpu_custom_call.1} parent=11 // pred_fallthru
          _
      $region12: #{tpu_custom_call.1} parent=5 // pred_fallthru
        _
      %p257 = scmp.lt.s32.totalorder %s18, 2
      // Predicated region
      $region33: #{tpu_custom_call.1} parent=5 // pred_check
        %p258 = pneg %p257
      $region34: #{tpu_custom_call.1} parent=5 // pred_check_branch
        %260 = sbr.rel (%p258) target = $region36
      $region35: #{tpu_custom_call.1} parent=5 // pred_region
        // Predicated region
        $region37: #{tpu_custom_call.1} parent=35 // pred_check
          %p261 = pneg %p38
        $region38: #{tpu_custom_call.1} parent=35 // pred_check_branch
          %263 = sbr.rel (%p261) target = $region40
        $region39: #{tpu_custom_call.1} parent=35 // pred_region
          %p264 = scmp.lt.s32.totalorder %s18, 1
          %s265 = scalar_select %p264, %s18, 1
          %s266 = smul.addr %s265, 7
          %s267 = smul.addr %s266, 8
          %s268 = scalar_lea.vmem %s0, %s267
        $region40: #{tpu_custom_call.1} parent=35 // pred_fallthru
          _
        // Predicated region
        $region41: #{tpu_custom_call.1} parent=35 // pred_check
          %p269 = pneg %p64
        $region42: #{tpu_custom_call.1} parent=35 // pred_check_branch
          %271 = sbr.rel (%p269) target = $region44
        $region43: #{tpu_custom_call.1} parent=35 // pred_region
          %p272 = scmp.lt.s32.totalorder %s18, 1
          %s273 = scalar_select %p272, %s18, 1
          %s274 = smul.addr %s273, 8
          %s275 = scalar_lea.vmem %s1, %s274
        $region44: #{tpu_custom_call.1} parent=35 // pred_fallthru
          _
      $region36: #{tpu_custom_call.1} parent=5 // pred_fallthru
        _
      %p276 = scmp.le.s32.totalorder 1, %s18
      %p277 = scmp.lt.s32.totalorder %s18, 3
      %p278 = pnand %p276, %p277
      %p279 = pneg %p278
      // Predicated region
      $region45: #{tpu_custom_call.1} parent=5 // pred_check
        _
      $region46: #{tpu_custom_call.1} parent=5 // pred_check_branch
        %281 = sbr.rel (%p278) target = $region48
      $region47: #{tpu_custom_call.1} parent=5 // pred_region
        %s282 = ssub.s32 %s18, 1
        %p283 = scmp.lt.s32.totalorder %s23, 1
        %s284 = scalar_select %p283, %s23, 1
        %s285 = smul.addr %s284, 7
        %s286 = smul.addr %s285, 8
        %s287 = scalar_lea.vmem %s0, %s286
        %p288 = pneg %p44
        %p289 = pneg %p41
        %p290 = scmp.lt.s32.totalorder %s23, 1
        %s291 = scalar_select %p290, %s23, 1
        %s292 = smul.addr %s291, 8
        %s293 = scalar_lea.vmem %s1, %s292
        %p294 = pneg %p70
        %p295 = pneg %p67
        %p296 = pneg %p91
        %p297 = pneg %p88
        %p298 = pneg %p112
        %p299 = pneg %p109
        %p300 = pneg %p133
        %p301 = pneg %p130
        %p302 = pneg %p154
        %p303 = pneg %p151
        %p304 = pneg %p175
        %p305 = pneg %p172
        %p306 = pneg %p201
        %p307 = pneg %p198
        %p308 = scmp.lt.s32.totalorder %s23, 1
        %s309 = scalar_select %p308, %s23, 1
        %s310 = smul.addr %s309, 8
        %s311 = scalar_lea.vmem %s7, %s310
        %p312 = pneg %p227
        %p313 = pneg %p224
        %s314 = sand.u32 %s214, 1
        %s315 = scalar_lea.sflag [#allocation3], %s314
        %s316 = sand.u32 %s214, 1
        %s317 = smul.addr %s316, 56
        %s318 = scalar_lea.vmem [#allocation2], %s317
        %p319 = scmp.lt.s32.totalorder %s23, 1
        %s320 = scalar_select %p319, %s23, 1
        %s321 = smul.addr %s320, 7
        %s322 = smul.addr %s321, 8
        %s323 = scalar_lea.vmem %s0, %s322
        %p324 = scmp.lt.s32.totalorder %s23, 1
        %s325 = scalar_select %p324, %s23, 1
        %s326 = smul.addr %s325, 8
        %s327 = scalar_lea.vmem %s1, %s326
        %p328 = scmp.lt.s32.totalorder %s23, 1
        %s329 = scalar_select %p328, %s23, 1
        %s330 = smul.addr %s329, 8
        %s331 = scalar_lea.vmem %s7, %s330
        %v333 = vld [vmem:[%s323] sm:$0xff]
        %v334 = vld [vmem:[%s323 + $0x8] sm:$0xff]
        %v335 = vld [vmem:[%s323 + $0x10] sm:$0xff]
        %v336 = vld [vmem:[%s323 + $0x18] sm:$0xff]
        %v337 = vld [vmem:[%s323 + $0x20] sm:$0xff]
        %v338 = vld [vmem:[%s323 + $0x28] sm:$0xff]
        %v339 = vld [vmem:[%s323 + $0x30] sm:$0xff]
        %v340 = vld [vmem:[%s327] sm:$0xff]
        %v341 = vld [vmem:[%s6] ss:$0 sm:$0xff]
        %v342 = vld [vmem:[%s6 + $0x1] ss:$0 sm:$0xff]
        %v343 = vld [vmem:[%s6 + $0x2] ss:$0 sm:$0xff]
        %v344 = vld [vmem:[%s6 + $0x3] ss:$0 sm:$0xff]
        %s345 = scalar_lea.vmem %s6, 4
        %v346 = vld [vmem:[%s345] ss:$8 sm:$0xf]
        %v347 = vld [vmem:[%s345] ss:$8 sm:$0x70]
        %v348 = vor.u32 %v346, %v347
        %s349 = scalar_lea.vmem %s6, 5
        %v350 = vld [vmem:[%s349] ss:$8 sm:$0xf]
        %v351 = vld [vmem:[%s349] ss:$8 sm:$0x70]
        %v352 = vor.u32 %v350, %v351
        %v353 = vpack.c.bf16 %v333, %v333
        %v354 = vpack.c.bf16 %v334, %v334
        %v355 = vpack.c.bf16 %v335, %v335
        %v356 = vpack.c.bf16 %v336, %v336
        %v357 = vpack.c.bf16 %v337, %v337
        %v358 = vpack.c.bf16 %v338, %v338
        %v359 = vpack.c.bf16 %v339, %v339
        %v360 = vld [vmem:[%s2] sm:$0xf]
        %v361 = vld [vmem:[%s2 + $0x4] sm:$0xf]
        %v362 = vld [vmem:[%s2 + $0x8] sm:$0xf]
        %v363 = vld [vmem:[%s2 + $0xc] sm:$0xf]
        %v364 = vld [vmem:[%s2 + $0x10] sm:$0xf]
        %v365 = vld [vmem:[%s2 + $0x14] sm:$0xf]
        %v366 = vld [vmem:[%s2 + $0x18] sm:$0xf]
        %v367 = vld [vmem:[%s2 + $0x1c] sm:$0xf]
        %v368 = vld [vmem:[%s2 + $0x20] sm:$0xf]
        %v369 = vld [vmem:[%s2 + $0x24] sm:$0xf]
        %v370 = vld [vmem:[%s2 + $0x28] sm:$0xf]
        %v371 = vld [vmem:[%s2 + $0x2c] sm:$0xf]
        %v372 = vld [vmem:[%s2 + $0x30] sm:$0xf]
        %v373 = vld [vmem:[%s2 + $0x34] sm:$0xf]
        %v374 = vld [vmem:[%s2 + $0x38] sm:$0xf]
        %v375 = vld [vmem:[%s2 + $0x3c] sm:$0xf]
        %v376 = vld [vmem:[%s2 + $0x40] sm:$0xf]
        %v377 = vld [vmem:[%s2 + $0x44] sm:$0xf]
        %v378 = vld [vmem:[%s2 + $0x48] sm:$0xf]
        %v379 = vld [vmem:[%s2 + $0x4c] sm:$0xf]
        %v380 = vld [vmem:[%s2 + $0x50] sm:$0xf]
        %v381 = vld [vmem:[%s2 + $0x54] sm:$0xf]
        %v382 = vld [vmem:[%s2 + $0x58] sm:$0xf]
        %v383 = vld [vmem:[%s2 + $0x5c] sm:$0xf]
        %v384 = vld [vmem:[%s2 + $0x60] sm:$0xf]
        %v385 = vld [vmem:[%s2 + $0x64] sm:$0xf]
        %v386 = vld [vmem:[%s2 + $0x68] sm:$0xf]
        %v387 = vld [vmem:[%s2 + $0x6c] sm:$0xf]
        %v388 = vld [vmem:[%s2 + $0x70] sm:$0xf]
        %v389 = vld [vmem:[%s2 + $0x74] sm:$0xf]
        %v390 = vld [vmem:[%s2 + $0x78] sm:$0xf]
        %v391 = vld [vmem:[%s2 + $0x7c] sm:$0xf]
        %v392 = vld [vmem:[%s2 + $0x80] sm:$0xf]
        %v393 = vld [vmem:[%s2 + $0x84] sm:$0xf]
        %v394 = vld [vmem:[%s2 + $0x88] sm:$0xf]
        %v395 = vld [vmem:[%s2 + $0x8c] sm:$0xf]
        %v396 = vld [vmem:[%s2 + $0x90] sm:$0xf]
        %v397 = vld [vmem:[%s2 + $0x94] sm:$0xf]
        %v398 = vld [vmem:[%s2 + $0x98] sm:$0xf]
        %v399 = vld [vmem:[%s2 + $0x9c] sm:$0xf]
        %v400 = vld [vmem:[%s2 + $0xa0] sm:$0xf]
        %v401 = vld [vmem:[%s2 + $0xa4] sm:$0xf]
        %v402 = vld [vmem:[%s2 + $0xa8] sm:$0xf]
        %v403 = vld [vmem:[%s2 + $0xac] sm:$0xf]
        %v404 = vld [vmem:[%s2 + $0xb0] sm:$0xf]
        %v405 = vld [vmem:[%s2 + $0xb4] sm:$0xf]
        %v406 = vld [vmem:[%s2 + $0xb8] sm:$0xf]
        %v407 = vld [vmem:[%s2 + $0xbc] sm:$0xf]
        %v408 = vld [vmem:[%s2 + $0xc0] sm:$0xf]
        %v409 = vld [vmem:[%s2 + $0xc4] sm:$0xf]
        %v410 = vld [vmem:[%s2 + $0xc8] sm:$0xf]
        %v411 = vld [vmem:[%s2 + $0xcc] sm:$0xf]
        %v412 = vld [vmem:[%s2 + $0xd0] sm:$0xf]
        %v413 = vld [vmem:[%s2 + $0xd4] sm:$0xf]
        %v414 = vld [vmem:[%s2 + $0xd8] sm:$0xf]
        %v415 = vld [vmem:[%s2 + $0xdc] sm:$0xf]
        %v416 = vld [vmem:[%s2 + $0xe0] sm:$0xf]
        %v417 = vld [vmem:[%s2 + $0xe4] sm:$0xf]
        %v418 = vld [vmem:[%s2 + $0xe8] sm:$0xf]
        %v419 = vld [vmem:[%s2 + $0xec] sm:$0xf]
        %v420 = vld [vmem:[%s2 + $0xf0] sm:$0xf]
        %v421 = vld [vmem:[%s2 + $0xf4] sm:$0xf]
        %v422 = vld [vmem:[%s2 + $0xf8] sm:$0xf]
        %v423 = vld [vmem:[%s2 + $0xfc] sm:$0xf]
        %v424 = vld [vmem:[%s2 + $0x100] sm:$0xf]
        %v425 = vld [vmem:[%s2 + $0x104] sm:$0xf]
        %v426 = vld [vmem:[%s2 + $0x108] sm:$0xf]
        %v427 = vld [vmem:[%s2 + $0x10c] sm:$0xf]
        %v428 = vld [vmem:[%s2 + $0x110] sm:$0xf]
        %v429 = vld [vmem:[%s2 + $0x114] sm:$0xf]
        %v430 = vld [vmem:[%s2 + $0x118] sm:$0xf]
        %v431 = vld [vmem:[%s2 + $0x11c] sm:$0xf]
        %v432 = vld [vmem:[%s2 + $0x120] sm:$0xf]
        %v433 = vld [vmem:[%s2 + $0x124] sm:$0xf]
        %v434 = vld [vmem:[%s2 + $0x128] sm:$0xf]
        %v435 = vld [vmem:[%s2 + $0x12c] sm:$0xf]
        %v436 = vld [vmem:[%s2 + $0x130] sm:$0xf]
        %v437 = vld [vmem:[%s2 + $0x134] sm:$0xf]
        %v438 = vld [vmem:[%s2 + $0x138] sm:$0xf]
        %v439 = vld [vmem:[%s2 + $0x13c] sm:$0xf]
        %v440 = vld [vmem:[%s2 + $0x140] sm:$0xf]
        %v441 = vld [vmem:[%s2 + $0x144] sm:$0xf]
        %v442 = vld [vmem:[%s2 + $0x148] sm:$0xf]
        %v443 = vld [vmem:[%s2 + $0x14c] sm:$0xf]
        %v444 = vld [vmem:[%s2 + $0x150] sm:$0xf]
        %v445 = vld [vmem:[%s2 + $0x154] sm:$0xf]
        %v446 = vld [vmem:[%s2 + $0x158] sm:$0xf]
        %v447 = vld [vmem:[%s2 + $0x15c] sm:$0xf]
        %v448 = vld [vmem:[%s2 + $0x160] sm:$0xf]
        %v449 = vld [vmem:[%s2 + $0x164] sm:$0xf]
        %v450 = vld [vmem:[%s2 + $0x168] sm:$0xf]
        %v451 = vld [vmem:[%s2 + $0x16c] sm:$0xf]
        %v452 = vld [vmem:[%s2 + $0x170] sm:$0xf]
        %v453 = vld [vmem:[%s2 + $0x174] sm:$0xf]
        %v454 = vld [vmem:[%s2 + $0x178] sm:$0xf]
        %v455 = vld [vmem:[%s2 + $0x17c] sm:$0xf]
        %v456 = vld [vmem:[%s2 + $0x180] sm:$0xf]
        %v457 = vld [vmem:[%s2 + $0x184] sm:$0xf]
        %v556 = vunpack.c.l.b16 %v360
        %v557 = vunpack.c.l.b16 %v361
        %v558 = vunpack.c.l.b16 %v362
        %v559 = vunpack.c.l.b16 %v363
        %v560 = vunpack.c.l.b16 %v364
        %v561 = vunpack.c.l.b16 %v365
        %v562 = vunpack.c.l.b16 %v366
        %v563 = vunpack.c.l.b16 %v367
        %v564 = vunpack.c.l.b16 %v368
        %v565 = vunpack.c.l.b16 %v369
        %v566 = vunpack.c.l.b16 %v370
        %v567 = vunpack.c.l.b16 %v371
        %v568 = vunpack.c.l.b16 %v372
        %v569 = vunpack.c.l.b16 %v373
        %v570 = vunpack.c.l.b16 %v374
        %v571 = vunpack.c.l.b16 %v375
        %v572 = vunpack.c.l.b16 %v376
        %v573 = vunpack.c.l.b16 %v377
        %v574 = vunpack.c.l.b16 %v378
        %v575 = vunpack.c.l.b16 %v379
        %v576 = vunpack.c.l.b16 %v380
        %v577 = vunpack.c.l.b16 %v381
        %v578 = vunpack.c.l.b16 %v382
        %v579 = vunpack.c.l.b16 %v383
        %v580 = vunpack.c.l.b16 %v384
        %v581 = vunpack.c.l.b16 %v385
        %v582 = vunpack.c.l.b16 %v386
        %v583 = vunpack.c.l.b16 %v387
        %v584 = vunpack.c.l.b16 %v388
        %v585 = vunpack.c.l.b16 %v389
        %v586 = vunpack.c.l.b16 %v390
        %v587 = vunpack.c.l.b16 %v391
        %v588 = vunpack.c.l.b16 %v392
        %v589 = vunpack.c.l.b16 %v393
        %v590 = vunpack.c.l.b16 %v394
        %v591 = vunpack.c.l.b16 %v395
        %v592 = vunpack.c.l.b16 %v396
        %v593 = vunpack.c.l.b16 %v397
        %v594 = vunpack.c.l.b16 %v398
        %v595 = vunpack.c.l.b16 %v399
        %v596 = vunpack.c.l.b16 %v400
        %v597 = vunpack.c.l.b16 %v401
        %v598 = vunpack.c.l.b16 %v402
        %v599 = vunpack.c.l.b16 %v403
        %v600 = vunpack.c.l.b16 %v404
        %v601 = vunpack.c.l.b16 %v405
        %v602 = vunpack.c.l.b16 %v406
        %v603 = vunpack.c.l.b16 %v407
        %v604 = vunpack.c.l.b16 %v408
        %v605 = vunpack.c.l.b16 %v409
        %v606 = vunpack.c.l.b16 %v410
        %v607 = vunpack.c.l.b16 %v411
        %v608 = vunpack.c.l.b16 %v412
        %v609 = vunpack.c.l.b16 %v413
        %v610 = vunpack.c.l.b16 %v414
        %v611 = vunpack.c.l.b16 %v415
        %v612 = vunpack.c.l.b16 %v416
        %v613 = vunpack.c.l.b16 %v417
        %v614 = vunpack.c.l.b16 %v418
        %v615 = vunpack.c.l.b16 %v419
        %v616 = vunpack.c.l.b16 %v420
        %v617 = vunpack.c.l.b16 %v421
        %v618 = vunpack.c.l.b16 %v422
        %v619 = vunpack.c.l.b16 %v423
        %v620 = vunpack.c.l.b16 %v424
        %v621 = vunpack.c.l.b16 %v425
        %v622 = vunpack.c.l.b16 %v426
        %v623 = vunpack.c.l.b16 %v427
        %v624 = vunpack.c.l.b16 %v428
        %v625 = vunpack.c.l.b16 %v429
        %v626 = vunpack.c.l.b16 %v430
        %v627 = vunpack.c.l.b16 %v431
        %v628 = vunpack.c.l.b16 %v432
        %v629 = vunpack.c.l.b16 %v433
        %v630 = vunpack.c.l.b16 %v434
        %v631 = vunpack.c.l.b16 %v435
        %v632 = vunpack.c.l.b16 %v436
        %v633 = vunpack.c.l.b16 %v437
        %v634 = vunpack.c.l.b16 %v438
        %v635 = vunpack.c.l.b16 %v439
        %v636 = vunpack.c.l.b16 %v440
        %v637 = vunpack.c.l.b16 %v441
        %v638 = vunpack.c.l.b16 %v442
        %v639 = vunpack.c.l.b16 %v443
        %v640 = vunpack.c.l.b16 %v444
        %v641 = vunpack.c.l.b16 %v445
        %v642 = vunpack.c.l.b16 %v446
        %v643 = vunpack.c.l.b16 %v447
        %v644 = vunpack.c.l.b16 %v448
        %v645 = vunpack.c.l.b16 %v449
        %v646 = vunpack.c.l.b16 %v450
        %v647 = vunpack.c.l.b16 %v451
        %v648 = vunpack.c.l.b16 %v452
        %v649 = vunpack.c.l.b16 %v453
        %v650 = vunpack.c.l.b16 %v454
        %v651 = vunpack.c.l.b16 %v455
        %v652 = vunpack.c.l.b16 %v456
        %v653 = vunpack.c.l.b16 %v457
        %v654 = vpack.c.b16 %v557, %v556
        %v655 = vpack.c.b16 %v559, %v558
        %v656 = vpack.c.b16 %v561, %v560
        %v657 = vpack.c.b16 %v563, %v562
        %v658 = vpack.c.b16 %v565, %v564
        %v659 = vpack.c.b16 %v567, %v566
        %v660 = vpack.c.b16 %v569, %v568
        %v661 = vpack.c.b16 %v571, %v570
        %v662 = vpack.c.b16 %v573, %v572
        %v663 = vpack.c.b16 %v575, %v574
        %v664 = vpack.c.b16 %v577, %v576
        %v665 = vpack.c.b16 %v579, %v578
        %v666 = vpack.c.b16 %v581, %v580
        %v667 = vpack.c.b16 %v583, %v582
        %v668 = vpack.c.b16 %v585, %v584
        %v669 = vpack.c.b16 %v587, %v586
        %v670 = vpack.c.b16 %v589, %v588
        %v671 = vpack.c.b16 %v591, %v590
        %v672 = vpack.c.b16 %v593, %v592
        %v673 = vpack.c.b16 %v595, %v594
        %v674 = vpack.c.b16 %v597, %v596
        %v675 = vpack.c.b16 %v599, %v598
        %v676 = vpack.c.b16 %v601, %v600
        %v677 = vpack.c.b16 %v603, %v602
        %v678 = vpack.c.b16 %v605, %v604
        %v679 = vpack.c.b16 %v607, %v606
        %v680 = vpack.c.b16 %v609, %v608
        %v681 = vpack.c.b16 %v611, %v610
        %v682 = vpack.c.b16 %v613, %v612
        %v683 = vpack.c.b16 %v615, %v614
        %v684 = vpack.c.b16 %v617, %v616
        %v685 = vpack.c.b16 %v619, %v618
        %v686 = vpack.c.b16 %v621, %v620
        %v687 = vpack.c.b16 %v623, %v622
        %v688 = vpack.c.b16 %v625, %v624
        %v689 = vpack.c.b16 %v627, %v626
        %v690 = vpack.c.b16 %v629, %v628
        %v691 = vpack.c.b16 %v631, %v630
        %v692 = vpack.c.b16 %v633, %v632
        %v693 = vpack.c.b16 %v635, %v634
        %v694 = vpack.c.b16 %v637, %v636
        %v695 = vpack.c.b16 %v639, %v638
        %v696 = vpack.c.b16 %v641, %v640
        %v697 = vpack.c.b16 %v643, %v642
        %v698 = vpack.c.b16 %v645, %v644
        %v699 = vpack.c.b16 %v647, %v646
        %v700 = vpack.c.b16 %v649, %v648
        %v701 = vpack.c.b16 %v651, %v650
        %v702 = vpack.c.b16 %v653, %v652
        %vm752 = vcmask 130048
        %v754 = vsel %vm752, %v359, 0
        %756 = vmatprep.subr.bf16.mxu0 0
        %757 = vmatpush1.bf16.msra.mxu0 %v654
        %758 = vmatprep.subr.bf16.mxu0 0
        %759 = vmatpush1.bf16.msra.mxu0 %v655
        %760 = vmatprep.subr.bf16.mxu0 0
        %761 = vmatpush1.bf16.msra.mxu0 %v656
        %762 = vmatprep.subr.bf16.mxu0 0
        %763 = vmatpush1.bf16.msra.mxu0 %v657
        %764 = vmatprep.subr.bf16.mxu0 0
        %765 = vmatpush1.bf16.msra.mxu0 %v658
        %766 = vmatprep.subr.bf16.mxu0 0
        %767 = vmatpush1.bf16.msra.mxu0 %v659
        %768 = vmatprep.subr.bf16.mxu0 0
        %769 = vmatpush1.bf16.msra.mxu0 %v660
        %770 = vmatprep.subr.bf16.mxu0 0
        %771 = vmatpush1.bf16.msra.mxu0 %v661
        %772 = vmatprep.subr.bf16.mxu0 0
        %773 = vmatpush1.bf16.msra.mxu0 %v662
        %774 = vmatprep.subr.bf16.mxu0 0
        %775 = vmatpush1.bf16.msra.mxu0 %v663
        %776 = vmatprep.subr.bf16.mxu0 0
        %777 = vmatpush1.bf16.msra.mxu0 %v664
        %778 = vmatprep.subr.bf16.mxu0 0
        %779 = vmatpush1.bf16.msra.mxu0 %v665
        %780 = vmatprep.subr.bf16.mxu0 0
        %781 = vmatpush1.bf16.msra.mxu0 %v666
        %782 = vmatprep.subr.bf16.mxu0 0
        %783 = vmatpush1.bf16.msra.mxu0 %v667
        %784 = vmatprep.subr.bf16.mxu0 0
        %785 = vmatpush1.bf16.msra.mxu0 %v668
        %786 = vmatprep.subr.bf16.mxu0 0
        %787 = vmatpush1.bf16.msra.mxu0 %v669
        %788 = vmatprep.mubr.bf16.mxu0 %v354
        %789 = vmatmul.mubr.bf16.gmra.mrb[0].mxu0 %v353
        %v790 = vpop.f32.mrb[0].mxu0
        %v791 = vadd.f32 %v341, %v790
        %v792 = vpop.f32.mrb[0].mxu0
        %v793 = vpop.f32.mrb[0].mxu0
        %v794 = vpop.f32.mrb[0].mxu0
        %795 = vdwg.mxu0
        %796 = vmatprep.subr.bf16.mxu0 0
        %797 = vmatpush1.bf16.msra.mxu0 %v670
        %798 = vmatprep.subr.bf16.mxu0 0
        %799 = vmatpush1.bf16.msra.mxu0 %v671
        %800 = vmatprep.subr.bf16.mxu0 0
        %801 = vmatpush1.bf16.msra.mxu0 %v672
        %802 = vmatprep.subr.bf16.mxu0 0
        %803 = vmatpush1.bf16.msra.mxu0 %v673
        %804 = vmatprep.subr.bf16.mxu0 0
        %805 = vmatpush1.bf16.msra.mxu0 %v674
        %806 = vmatprep.subr.bf16.mxu0 0
        %807 = vmatpush1.bf16.msra.mxu0 %v675
        %808 = vmatprep.subr.bf16.mxu0 0
        %809 = vmatpush1.bf16.msra.mxu0 %v676
        %810 = vmatprep.subr.bf16.mxu0 0
        %811 = vmatpush1.bf16.msra.mxu0 %v677
        %812 = vmatprep.subr.bf16.mxu0 0
        %813 = vmatpush1.bf16.msra.mxu0 %v678
        %814 = vmatprep.subr.bf16.mxu0 0
        %815 = vmatpush1.bf16.msra.mxu0 %v679
        %816 = vmatprep.subr.bf16.mxu0 0
        %817 = vmatpush1.bf16.msra.mxu0 %v680
        %818 = vmatprep.subr.bf16.mxu0 0
        %819 = vmatpush1.bf16.msra.mxu0 %v681
        %820 = vmatprep.subr.bf16.mxu0 0
        %821 = vmatpush1.bf16.msra.mxu0 %v682
        %822 = vmatprep.subr.bf16.mxu0 0
        %823 = vmatpush1.bf16.msra.mxu0 %v683
        %824 = vmatprep.subr.bf16.mxu0 0
        %825 = vmatpush1.bf16.msra.mxu0 %v684
        %826 = vmatprep.subr.bf16.mxu0 0
        %827 = vmatpush1.bf16.msra.mxu0 %v685
        %828 = vmatprep.mubr.bf16.mxu0 %v356
        %829 = vmatmul.mubr.bf16.gmra.mrb[0].mxu0 %v355
        %v830 = vpop.f32.mrb[0].mxu0
        %v831 = vadd.f32 %v791, %v830
        %v832 = vpop.f32.mrb[0].mxu0
        %v833 = vpop.f32.mrb[0].mxu0
        %v834 = vpop.f32.mrb[0].mxu0
        %835 = vdwg.mxu0
        %836 = vmatprep.subr.bf16.mxu0 0
        %837 = vmatpush1.bf16.msra.mxu0 %v686
        %838 = vmatprep.subr.bf16.mxu0 0
        %839 = vmatpush1.bf16.msra.mxu0 %v687
        %840 = vmatprep.subr.bf16.mxu0 0
        %841 = vmatpush1.bf16.msra.mxu0 %v688
        %842 = vmatprep.subr.bf16.mxu0 0
        %843 = vmatpush1.bf16.msra.mxu0 %v689
        %844 = vmatprep.subr.bf16.mxu0 0
        %845 = vmatpush1.bf16.msra.mxu0 %v690
        %846 = vmatprep.subr.bf16.mxu0 0
        %847 = vmatpush1.bf16.msra.mxu0 %v691
        %848 = vmatprep.subr.bf16.mxu0 0
        %849 = vmatpush1.bf16.msra.mxu0 %v692
        %850 = vmatprep.subr.bf16.mxu0 0
        %851 = vmatpush1.bf16.msra.mxu0 %v693
        %852 = vmatprep.subr.bf16.mxu0 0
        %853 = vmatpush1.bf16.msra.mxu0 %v694
        %854 = vmatprep.subr.bf16.mxu0 0
        %855 = vmatpush1.bf16.msra.mxu0 %v695
        %856 = vmatprep.subr.bf16.mxu0 0
        %857 = vmatpush1.bf16.msra.mxu0 %v696
        %858 = vmatprep.subr.bf16.mxu0 0
        %859 = vmatpush1.bf16.msra.mxu0 %v697
        %860 = vmatprep.subr.bf16.mxu0 0
        %861 = vmatpush1.bf16.msra.mxu0 %v698
        %862 = vmatprep.subr.bf16.mxu0 0
        %863 = vmatpush1.bf16.msra.mxu0 %v699
        %864 = vmatprep.subr.bf16.mxu0 0
        %865 = vmatpush1.bf16.msra.mxu0 %v700
        %866 = vmatprep.subr.bf16.mxu0 0
        %867 = vmatpush1.bf16.msra.mxu0 %v701
        %868 = vmatprep.mubr.bf16.mxu0 %v358
        %869 = vmatmul.mubr.bf16.gmra.mrb[0].mxu0 %v357
        %v870 = vpop.f32.mrb[0].mxu0
        %v871 = vadd.f32 %v831, %v870
        %v872 = vpop.f32.mrb[0].mxu0
        %v873 = vpop.f32.mrb[0].mxu0
        %v874 = vpop.f32.mrb[0].mxu0
        %875 = vdwg.mxu0
        %876 = vmatprep.subr.bf16.mxu0 0
        %877 = vmatpush1.bf16.msra.mxu0 %v702
        %878 = vmatprep.subr.bf16.mxu0 0
        %879 = vmatpush1.bf16.msra.mxu0 0
        %880 = vmatprep.subr.bf16.mxu0 0
        %881 = vmatpush1.bf16.msra.mxu0 0
        %882 = vmatprep.subr.bf16.mxu0 0
        %883 = vmatpush1.bf16.msra.mxu0 0
        %884 = vmatprep.subr.bf16.mxu0 0
        %885 = vmatpush1.bf16.msra.mxu0 0
        %886 = vmatprep.subr.bf16.mxu0 0
        %887 = vmatpush1.bf16.msra.mxu0 0
        %888 = vmatprep.subr.bf16.mxu0 0
        %889 = vmatpush1.bf16.msra.mxu0 0
        %890 = vmatprep.subr.bf16.mxu0 0
        %891 = vmatpush1.bf16.msra.mxu0 0
        %892 = vmatprep.subr.bf16.mxu0 0
        %893 = vmatpush1.bf16.msra.mxu0 0
        %894 = vmatprep.subr.bf16.mxu0 0
        %895 = vmatpush1.bf16.msra.mxu0 0
        %896 = vmatprep.subr.bf16.mxu0 0
        %897 = vmatpush1.bf16.msra.mxu0 0
        %898 = vmatprep.subr.bf16.mxu0 0
        %899 = vmatpush1.bf16.msra.mxu0 0
        %900 = vmatprep.subr.bf16.mxu0 0
        %901 = vmatpush1.bf16.msra.mxu0 0
        %902 = vmatprep.subr.bf16.mxu0 0
        %903 = vmatpush1.bf16.msra.mxu0 0
        %904 = vmatprep.subr.bf16.mxu0 0
        %905 = vmatpush1.bf16.msra.mxu0 0
        %906 = vmatprep.subr.bf16.mxu0 0
        %907 = vmatpush1.bf16.msra.mxu0 0
        %908 = vmatprep.mubr.bf16.mxu0 0
        %909 = vmatmul.mubr.bf16.gmra.mrb[0].mxu0 %v754
        %v910 = vpop.f32.mrb[0].mxu0
        %v911 = vadd.f32 %v871, %v910
        %v912 = vpop.f32.mrb[0].mxu0
        %v913 = vpop.f32.mrb[0].mxu0
        %v914 = vpop.f32.mrb[0].mxu0
        %915 = vdwg.mxu0
        %v916 = vmax.f32 %v911, 0.0
        %v917 = vld [vmem:[%s4] sm:$0xff]
        %v918 = vld [vmem:[%s4 + $0x8] sm:$0xff]
        %v919 = vld [vmem:[%s4 + $0x10] sm:$0xff]
        %v920 = vld [vmem:[%s4 + $0x18] sm:$0xff]
        %vm921 = vcmask 261120
        %v923 = vsel %vm921, %v916, 0
        %925 = vmatprep.subr.mxu0 0.0
        %926 = vmatpush1.msra.mxu0 %v917
        %927 = vmatprep.subr.mxu0 0.0
        %928 = vmatpush1.msra.mxu0 %v918
        %929 = vmatprep.subr.mxu0 0.0
        %930 = vmatpush1.msra.mxu0 %v919
        %931 = vmatprep.subr.mxu0 0.0
        %932 = vmatpush1.msra.mxu0 %v920
        %933 = vmatprep.subr.mxu0 0.0
        %934 = vmatpush1.msra.mxu0 0.0
        %935 = vmatprep.subr.mxu0 0.0
        %936 = vmatpush1.msra.mxu0 0.0
        %937 = vmatprep.subr.mxu0 0.0
        %938 = vmatpush1.msra.mxu0 0.0
        %939 = vmatprep.subr.mxu0 0.0
        %940 = vmatpush1.msra.mxu0 0.0
        %941 = vmatprep.subr.mxu0 0.0
        %942 = vmatpush1.msra.mxu0 0.0
        %943 = vmatprep.subr.mxu0 0.0
        %944 = vmatpush1.msra.mxu0 0.0
        %945 = vmatprep.subr.mxu0 0.0
        %946 = vmatpush1.msra.mxu0 0.0
        %947 = vmatprep.subr.mxu0 0.0
        %948 = vmatpush1.msra.mxu0 0.0
        %949 = vmatprep.subr.mxu0 0.0
        %950 = vmatpush1.msra.mxu0 0.0
        %951 = vmatprep.subr.mxu0 0.0
        %952 = vmatpush1.msra.mxu0 0.0
        %953 = vmatprep.subr.mxu0 0.0
        %954 = vmatpush1.msra.mxu0 0.0
        %955 = vmatprep.subr.mxu0 0.0
        %956 = vmatpush1.msra.mxu0 0.0
        %957 = vmatprep.subr.mxu0 0.0
        %958 = vmatpush1.msra.mxu0 0.0
        %959 = vmatprep.subr.mxu0 0.0
        %960 = vmatpush1.msra.mxu0 0.0
        %961 = vmatprep.subr.mxu0 0.0
        %962 = vmatpush1.msra.mxu0 0.0
        %963 = vmatprep.subr.mxu0 0.0
        %964 = vmatpush1.msra.mxu0 0.0
        %965 = vmatprep.subr.mxu0 0.0
        %966 = vmatpush1.msra.mxu0 0.0
        %967 = vmatprep.subr.mxu0 0.0
        %968 = vmatpush1.msra.mxu0 0.0
        %969 = vmatprep.subr.mxu0 0.0
        %970 = vmatpush1.msra.mxu0 0.0
        %971 = vmatprep.subr.mxu0 0.0
        %972 = vmatpush1.msra.mxu0 0.0
        %973 = vmatprep.subr.mxu0 0.0
        %974 = vmatpush1.msra.mxu0 0.0
        %975 = vmatprep.subr.mxu0 0.0
        %976 = vmatpush1.msra.mxu0 0.0
        %977 = vmatprep.subr.mxu0 0.0
        %978 = vmatpush1.msra.mxu0 0.0
        %979 = vmatprep.subr.mxu0 0.0
        %980 = vmatpush1.msra.mxu0 0.0
        %981 = vmatprep.subr.mxu0 0.0
        %982 = vmatpush1.msra.mxu0 0.0
        %983 = vmatprep.subr.mxu0 0.0
        %984 = vmatpush1.msra.mxu0 0.0
        %985 = vmatprep.subr.mxu0 0.0
        %986 = vmatpush1.msra.mxu0 0.0
        %987 = vmatprep.subr.mxu0 0.0
        %988 = vmatpush1.msra.mxu0 0.0
        %989 = vmatprep.mubr.f32.mxu0 0.0
        %990 = vmatmul.mubr.f32.gmra.mrb[0].mxu0 %v923
        %v991 = vpop.f32.mrb[0].mxu0
        %v992 = vadd.f32 %v342, %v991
        %v993 = vpop.f32.mrb[0].mxu0
        %994 = vdwg.mxu0
        %s995 = scalar_lea.vmem %s4, 32
        %v996 = vld [vmem:[%s995] sm:$0xff]
        %v997 = vld [vmem:[%s995 + $0x8] sm:$0xff]
        %v998 = vld [vmem:[%s995 + $0x10] sm:$0xff]
        %v999 = vld [vmem:[%s995 + $0x18] sm:$0xff]
        %1000 = vmatprep.subr.mxu0 0.0
        %1001 = vmatpush1.msra.mxu0 %v996
        %1002 = vmatprep.subr.mxu0 0.0
        %1003 = vmatpush1.msra.mxu0 %v997
        %1004 = vmatprep.subr.mxu0 0.0
        %1005 = vmatpush1.msra.mxu0 %v998
        %1006 = vmatprep.subr.mxu0 0.0
        %1007 = vmatpush1.msra.mxu0 %v999
        %1008 = vmatprep.subr.mxu0 0.0
        %1009 = vmatpush1.msra.mxu0 0.0
        %1010 = vmatprep.subr.mxu0 0.0
        %1011 = vmatpush1.msra.mxu0 0.0
        %1012 = vmatprep.subr.mxu0 0.0
        %1013 = vmatpush1.msra.mxu0 0.0
        %1014 = vmatprep.subr.mxu0 0.0
        %1015 = vmatpush1.msra.mxu0 0.0
        %1016 = vmatprep.subr.mxu0 0.0
        %1017 = vmatpush1.msra.mxu0 0.0
        %1018 = vmatprep.subr.mxu0 0.0
        %1019 = vmatpush1.msra.mxu0 0.0
        %1020 = vmatprep.subr.mxu0 0.0
        %1021 = vmatpush1.msra.mxu0 0.0
        %1022 = vmatprep.subr.mxu0 0.0
        %1023 = vmatpush1.msra.mxu0 0.0
        %1024 = vmatprep.subr.mxu0 0.0
        %1025 = vmatpush1.msra.mxu0 0.0
        %1026 = vmatprep.subr.mxu0 0.0
        %1027 = vmatpush1.msra.mxu0 0.0
        %1028 = vmatprep.subr.mxu0 0.0
        %1029 = vmatpush1.msra.mxu0 0.0
        %1030 = vmatprep.subr.mxu0 0.0
        %1031 = vmatpush1.msra.mxu0 0.0
        %1032 = vmatprep.subr.mxu0 0.0
        %1033 = vmatpush1.msra.mxu0 0.0
        %1034 = vmatprep.subr.mxu0 0.0
        %1035 = vmatpush1.msra.mxu0 0.0
        %1036 = vmatprep.subr.mxu0 0.0
        %1037 = vmatpush1.msra.mxu0 0.0
        %1038 = vmatprep.subr.mxu0 0.0
        %1039 = vmatpush1.msra.mxu0 0.0
        %1040 = vmatprep.subr.mxu0 0.0
        %1041 = vmatpush1.msra.mxu0 0.0
        %1042 = vmatprep.subr.mxu0 0.0
        %1043 = vmatpush1.msra.mxu0 0.0
        %1044 = vmatprep.subr.mxu0 0.0
        %1045 = vmatpush1.msra.mxu0 0.0
        %1046 = vmatprep.subr.mxu0 0.0
        %1047 = vmatpush1.msra.mxu0 0.0
        %1048 = vmatprep.subr.mxu0 0.0
        %1049 = vmatpush1.msra.mxu0 0.0
        %1050 = vmatprep.subr.mxu0 0.0
        %1051 = vmatpush1.msra.mxu0 0.0
        %1052 = vmatprep.subr.mxu0 0.0
        %1053 = vmatpush1.msra.mxu0 0.0
        %1054 = vmatprep.subr.mxu0 0.0
        %1055 = vmatpush1.msra.mxu0 0.0
        %1056 = vmatprep.subr.mxu0 0.0
        %1057 = vmatpush1.msra.mxu0 0.0
        %1058 = vmatprep.subr.mxu0 0.0
        %1059 = vmatpush1.msra.mxu0 0.0
        %1060 = vmatprep.subr.mxu0 0.0
        %1061 = vmatpush1.msra.mxu0 0.0
        %1062 = vmatprep.subr.mxu0 0.0
        %1063 = vmatpush1.msra.mxu0 0.0
        %1064 = vmatprep.mubr.f32.mxu0 0.0
        %1065 = vmatmul.mubr.f32.gmra.mrb[0].mxu0 %v923
        %v1066 = vpop.f32.mrb[0].mxu0
        %v1067 = vadd.f32 %v343, %v1066
        %v1068 = vpop.f32.mrb[0].mxu0
        %1069 = vdwg.mxu0
        %v1070 = vmul.f32 %v1067, 1.442695
        %v1071 = vpow.pop %v1070
        %v1072 = vmul.f32 %v1071, %v340
        %v1073 = vadd.f32 %v992, %v1072
        %v1074 = vld [vmem:[%s5] sm:$0xff]
        %vm1075 = vcmask 64512
        %v1077 = vsel %vm1075, %v1073, 0
        %1079 = vmatprep.subr.mxu0 0.0
        %1080 = vmatpush1.msra.mxu0 %v1074
        %1081 = vmatprep.subr.mxu0 0.0
        %1082 = vmatpush1.msra.mxu0 0.0
        %1083 = vmatprep.subr.mxu0 0.0
        %1084 = vmatpush1.msra.mxu0 0.0
        %1085 = vmatprep.subr.mxu0 0.0
        %1086 = vmatpush1.msra.mxu0 0.0
        %1087 = vmatprep.subr.mxu0 0.0
        %1088 = vmatpush1.msra.mxu0 0.0
        %1089 = vmatprep.subr.mxu0 0.0
        %1090 = vmatpush1.msra.mxu0 0.0
        %1091 = vmatprep.subr.mxu0 0.0
        %1092 = vmatpush1.msra.mxu0 0.0
        %1093 = vmatprep.subr.mxu0 0.0
        %1094 = vmatpush1.msra.mxu0 0.0
        %1095 = vmatprep.subr.mxu0 0.0
        %1096 = vmatpush1.msra.mxu0 0.0
        %1097 = vmatprep.subr.mxu0 0.0
        %1098 = vmatpush1.msra.mxu0 0.0
        %1099 = vmatprep.subr.mxu0 0.0
        %1100 = vmatpush1.msra.mxu0 0.0
        %1101 = vmatprep.subr.mxu0 0.0
        %1102 = vmatpush1.msra.mxu0 0.0
        %1103 = vmatprep.subr.mxu0 0.0
        %1104 = vmatpush1.msra.mxu0 0.0
        %1105 = vmatprep.subr.mxu0 0.0
        %1106 = vmatpush1.msra.mxu0 0.0
        %1107 = vmatprep.subr.mxu0 0.0
        %1108 = vmatpush1.msra.mxu0 0.0
        %1109 = vmatprep.subr.mxu0 0.0
        %1110 = vmatpush1.msra.mxu0 0.0
        %1111 = vmatprep.subr.mxu0 0.0
        %1112 = vmatpush1.msra.mxu0 0.0
        %1113 = vmatprep.subr.mxu0 0.0
        %1114 = vmatpush1.msra.mxu0 0.0
        %1115 = vmatprep.subr.mxu0 0.0
        %1116 = vmatpush1.msra.mxu0 0.0
        %1117 = vmatprep.subr.mxu0 0.0
        %1118 = vmatpush1.msra.mxu0 0.0
        %1119 = vmatprep.subr.mxu0 0.0
        %1120 = vmatpush1.msra.mxu0 0.0
        %1121 = vmatprep.subr.mxu0 0.0
        %1122 = vmatpush1.msra.mxu0 0.0
        %1123 = vmatprep.subr.mxu0 0.0
        %1124 = vmatpush1.msra.mxu0 0.0
        %1125 = vmatprep.subr.mxu0 0.0
        %1126 = vmatpush1.msra.mxu0 0.0
        %1127 = vmatprep.subr.mxu0 0.0
        %1128 = vmatpush1.msra.mxu0 0.0
        %1129 = vmatprep.subr.mxu0 0.0
        %1130 = vmatpush1.msra.mxu0 0.0
        %1131 = vmatprep.subr.mxu0 0.0
        %1132 = vmatpush1.msra.mxu0 0.0
        %1133 = vmatprep.subr.mxu0 0.0
        %1134 = vmatpush1.msra.mxu0 0.0
        %1135 = vmatprep.subr.mxu0 0.0
        %1136 = vmatpush1.msra.mxu0 0.0
        %1137 = vmatprep.subr.mxu0 0.0
        %1138 = vmatpush1.msra.mxu0 0.0
        %1139 = vmatprep.subr.mxu0 0.0
        %1140 = vmatpush1.msra.mxu0 0.0
        %1141 = vmatprep.subr.mxu0 0.0
        %1142 = vmatpush1.msra.mxu0 0.0
        %1143 = vmatprep.mubr.f32.mxu0 0.0
        %1144 = vmatmul.mubr.f32.gmra.mrb[0].mxu0 %v1077
        %v1145 = vpop.f32.mrb[0].mxu0
        %v1146 = vadd.f32 %v344, %v1145
        %v1147 = vpop.f32.mrb[0].mxu0
        %1148 = vdwg.mxu0
        %v1149 = vmax.f32 %v1146, 0.0
        %v1150 = vpack.c.bf16 %v1149, %v1149
        %v1151 = vld [vmem:[%s3] sm:$0xff]
        %v1152 = vld [vmem:[%s3 + $0x8] sm:$0xff]
        %v1153 = vld [vmem:[%s3 + $0x10] sm:$0xff]
        %v1154 = vld [vmem:[%s3 + $0x18] sm:$0xf]
        %v1155 = vld [vmem:[%s3 + $0x1c] sm:$0xff]
        %v1156 = vld [vmem:[%s3 + $0x24] sm:$0xff]
        %v1157 = vld [vmem:[%s3 + $0x2c] sm:$0xff]
        %v1158 = vld [vmem:[%s3 + $0x34] sm:$0xf]
        %v1159 = vld [vmem:[%s3 + $0x38] sm:$0xff]
        %v1160 = vld [vmem:[%s3 + $0x40] sm:$0xff]
        %v1161 = vld [vmem:[%s3 + $0x48] sm:$0xff]
        %v1162 = vld [vmem:[%s3 + $0x50] sm:$0xf]
        %v1163 = vld [vmem:[%s3 + $0x54] sm:$0xff]
        %v1164 = vld [vmem:[%s3 + $0x5c] sm:$0xff]
        %v1165 = vld [vmem:[%s3 + $0x64] sm:$0xff]
        %v1166 = vld [vmem:[%s3 + $0x6c] sm:$0xf]
        %v1168 = vlaneseq
        %v1169 = vshrl.u32 %v1168, 7
        %v1170 = vsub.s32 0, %v1169
        %v1171 = vrot.slane %v348, %v1170
        %v1172 = vlaneseq
        %v1173 = vshrl.u32 %v1172, 7
        %v1174 = vsub.s32 1, %v1173
        %v1175 = vrot.slane %v348, %v1174
        %v1176 = vlaneseq
        %v1177 = vshrl.u32 %v1176, 7
        %v1178 = vsub.s32 2, %v1177
        %v1179 = vrot.slane %v348, %v1178
        %v1180 = vlaneseq
        %v1181 = vshrl.u32 %v1180, 7
        %v1182 = vsub.s32 3, %v1181
        %v1183 = vrot.slane %v348, %v1182
        %v1184 = vlaneseq
        %v1185 = vshrl.u32 %v1184, 7
        %v1186 = vsub.s32 4, %v1185
        %v1187 = vrot.slane %v348, %v1186
        %v1188 = vlaneseq
        %v1189 = vshrl.u32 %v1188, 7
        %v1190 = vsub.s32 5, %v1189
        %v1191 = vrot.slane %v348, %v1190
        %v1192 = vlaneseq
        %v1193 = vshrl.u32 %v1192, 7
        %v1194 = vsub.s32 6, %v1193
        %v1195 = vrot.slane %v348, %v1194
        %v1219 = vunpack.c.l.b16 %v1151
        %v1220 = vunpack.c.h.b16 %v1151
        %v1221 = vunpack.c.l.b16 %v1152
        %v1222 = vunpack.c.h.b16 %v1152
        %v1223 = vunpack.c.l.b16 %v1153
        %v1224 = vunpack.c.h.b16 %v1153
        %v1225 = vunpack.c.l.b16 %v1154
        %v1226 = vunpack.c.l.b16 %v1155
        %v1227 = vunpack.c.h.b16 %v1155
        %v1228 = vunpack.c.l.b16 %v1156
        %v1229 = vunpack.c.h.b16 %v1156
        %v1230 = vunpack.c.l.b16 %v1157
        %v1231 = vunpack.c.h.b16 %v1157
        %v1232 = vunpack.c.l.b16 %v1158
        %v1233 = vunpack.c.l.b16 %v1159
        %v1234 = vunpack.c.h.b16 %v1159
        %v1235 = vunpack.c.l.b16 %v1160
        %v1236 = vunpack.c.h.b16 %v1160
        %v1237 = vunpack.c.l.b16 %v1161
        %v1238 = vunpack.c.h.b16 %v1161
        %v1239 = vunpack.c.l.b16 %v1162
        %v1240 = vunpack.c.l.b16 %v1163
        %v1241 = vunpack.c.h.b16 %v1163
        %v1242 = vunpack.c.l.b16 %v1164
        %v1243 = vunpack.c.h.b16 %v1164
        %v1244 = vunpack.c.l.b16 %v1165
        %v1245 = vunpack.c.h.b16 %v1165
        %v1246 = vunpack.c.l.b16 %v1166
        %v1247 = vpack.c.b16 %v1226, %v1219
        %v1248 = vpack.c.b16 %v1227, %v1220
        %v1249 = vpack.c.b16 %v1228, %v1221
        %v1250 = vpack.c.b16 %v1229, %v1222
        %v1251 = vpack.c.b16 %v1230, %v1223
        %v1252 = vpack.c.b16 %v1231, %v1224
        %v1253 = vpack.c.b16 %v1232, %v1225
        %v1254 = vpack.c.b16 %v1240, %v1233
        %v1255 = vpack.c.b16 %v1241, %v1234
        %v1256 = vpack.c.b16 %v1242, %v1235
        %v1257 = vpack.c.b16 %v1243, %v1236
        %v1258 = vpack.c.b16 %v1244, %v1237
        %v1259 = vpack.c.b16 %v1245, %v1238
        %v1260 = vpack.c.b16 %v1246, %v1239
        %v1276 = vsel %vm921, %v1150, 0
        %1278 = vmatprep.subr.bf16.mxu0 %v1248
        %1279 = vmatpush1.bf16.msra.mxu0 %v1247
        %1280 = vmatprep.subr.bf16.mxu0 %v1255
        %1281 = vmatpush1.bf16.msra.mxu0 %v1254
        %1282 = vmatprep.subr.bf16.mxu0 0
        %1283 = vmatpush1.bf16.msra.mxu0 0
        %1284 = vmatprep.subr.bf16.mxu0 0
        %1285 = vmatpush1.bf16.msra.mxu0 0
        %1286 = vmatprep.subr.bf16.mxu0 0
        %1287 = vmatpush1.bf16.msra.mxu0 0
        %1288 = vmatprep.subr.bf16.mxu0 0
        %1289 = vmatpush1.bf16.msra.mxu0 0
        %1290 = vmatprep.subr.bf16.mxu0 0
        %1291 = vmatpush1.bf16.msra.mxu0 0
        %1292 = vmatprep.subr.bf16.mxu0 0
        %1293 = vmatpush1.bf16.msra.mxu0 0
        %1294 = vmatprep.subr.bf16.mxu0 0
        %1295 = vmatpush1.bf16.msra.mxu0 0
        %1296 = vmatprep.subr.bf16.mxu0 0
        %1297 = vmatpush1.bf16.msra.mxu0 0
        %1298 = vmatprep.subr.bf16.mxu0 0
        %1299 = vmatpush1.bf16.msra.mxu0 0
        %1300 = vmatprep.subr.bf16.mxu0 0
        %1301 = vmatpush1.bf16.msra.mxu0 0
        %1302 = vmatprep.subr.bf16.mxu0 0
        %1303 = vmatpush1.bf16.msra.mxu0 0
        %1304 = vmatprep.subr.bf16.mxu0 0
        %1305 = vmatpush1.bf16.msra.mxu0 0
        %1306 = vmatprep.subr.bf16.mxu0 0
        %1307 = vmatpush1.bf16.msra.mxu0 0
        %1308 = vmatprep.subr.bf16.mxu0 0
        %1309 = vmatpush1.bf16.msra.mxu0 0
        %1310 = vmatprep.mubr.bf16.mxu0 0
        %1311 = vmatmul.mubr.bf16.gmra.mrb[0].mxu0 %v1276
        %v1312 = vpop.f32.mrb[0].mxu0
        %v1313 = vadd.f32 %v1171, %v1312
        %v1314 = vpop.f32.mrb[0].mxu0
        %v1315 = vadd.f32 %v1175, %v1314
        %v1316 = vpop.f32.mrb[0].mxu0
        %v1317 = vpop.f32.mrb[0].mxu0
        %1318 = vdwg.mxu0
        %1319 = vmatprep.subr.bf16.mxu0 %v1250
        %1320 = vmatpush1.bf16.msra.mxu0 %v1249
        %1321 = vmatprep.subr.bf16.mxu0 %v1257
        %1322 = vmatpush1.bf16.msra.mxu0 %v1256
        %1323 = vmatprep.subr.bf16.mxu0 0
        %1324 = vmatpush1.bf16.msra.mxu0 0
        %1325 = vmatprep.subr.bf16.mxu0 0
        %1326 = vmatpush1.bf16.msra.mxu0 0
        %1327 = vmatprep.subr.bf16.mxu0 0
        %1328 = vmatpush1.bf16.msra.mxu0 0
        %1329 = vmatprep.subr.bf16.mxu0 0
        %1330 = vmatpush1.bf16.msra.mxu0 0
        %1331 = vmatprep.subr.bf16.mxu0 0
        %1332 = vmatpush1.bf16.msra.mxu0 0
        %1333 = vmatprep.subr.bf16.mxu0 0
        %1334 = vmatpush1.bf16.msra.mxu0 0
        %1335 = vmatprep.subr.bf16.mxu0 0
        %1336 = vmatpush1.bf16.msra.mxu0 0
        %1337 = vmatprep.subr.bf16.mxu0 0
        %1338 = vmatpush1.bf16.msra.mxu0 0
        %1339 = vmatprep.subr.bf16.mxu0 0
        %1340 = vmatpush1.bf16.msra.mxu0 0
        %1341 = vmatprep.subr.bf16.mxu0 0
        %1342 = vmatpush1.bf16.msra.mxu0 0
        %1343 = vmatprep.subr.bf16.mxu0 0
        %1344 = vmatpush1.bf16.msra.mxu0 0
        %1345 = vmatprep.subr.bf16.mxu0 0
        %1346 = vmatpush1.bf16.msra.mxu0 0
        %1347 = vmatprep.subr.bf16.mxu0 0
        %1348 = vmatpush1.bf16.msra.mxu0 0
        %1349 = vmatprep.subr.bf16.mxu0 0
        %1350 = vmatpush1.bf16.msra.mxu0 0
        %1351 = vmatprep.mubr.bf16.mxu0 0
        %1352 = vmatmul.mubr.bf16.gmra.mrb[0].mxu0 %v1276
        %v1353 = vpop.f32.mrb[0].mxu0
        %v1354 = vadd.f32 %v1179, %v1353
        %v1355 = vpop.f32.mrb[0].mxu0
        %v1356 = vadd.f32 %v1183, %v1355
        %v1357 = vpop.f32.mrb[0].mxu0
        %v1358 = vpop.f32.mrb[0].mxu0
        %1359 = vdwg.mxu0
        %1360 = vmatprep.subr.bf16.mxu0 %v1252
        %1361 = vmatpush1.bf16.msra.mxu0 %v1251
        %1362 = vmatprep.subr.bf16.mxu0 %v1259
        %1363 = vmatpush1.bf16.msra.mxu0 %v1258
        %1364 = vmatprep.subr.bf16.mxu0 0
        %1365 = vmatpush1.bf16.msra.mxu0 0
        %1366 = vmatprep.subr.bf16.mxu0 0
        %1367 = vmatpush1.bf16.msra.mxu0 0
        %1368 = vmatprep.subr.bf16.mxu0 0
        %1369 = vmatpush1.bf16.msra.mxu0 0
        %1370 = vmatprep.subr.bf16.mxu0 0
        %1371 = vmatpush1.bf16.msra.mxu0 0
        %1372 = vmatprep.subr.bf16.mxu0 0
        %1373 = vmatpush1.bf16.msra.mxu0 0
        %1374 = vmatprep.subr.bf16.mxu0 0
        %1375 = vmatpush1.bf16.msra.mxu0 0
        %1376 = vmatprep.subr.bf16.mxu0 0
        %1377 = vmatpush1.bf16.msra.mxu0 0
        %1378 = vmatprep.subr.bf16.mxu0 0
        %1379 = vmatpush1.bf16.msra.mxu0 0
        %1380 = vmatprep.subr.bf16.mxu0 0
        %1381 = vmatpush1.bf16.msra.mxu0 0
        %1382 = vmatprep.subr.bf16.mxu0 0
        %1383 = vmatpush1.bf16.msra.mxu0 0
        %1384 = vmatprep.subr.bf16.mxu0 0
        %1385 = vmatpush1.bf16.msra.mxu0 0
        %1386 = vmatprep.subr.bf16.mxu0 0
        %1387 = vmatpush1.bf16.msra.mxu0 0
        %1388 = vmatprep.subr.bf16.mxu0 0
        %1389 = vmatpush1.bf16.msra.mxu0 0
        %1390 = vmatprep.subr.bf16.mxu0 0
        %1391 = vmatpush1.bf16.msra.mxu0 0
        %1392 = vmatprep.mubr.bf16.mxu0 0
        %1393 = vmatmul.mubr.bf16.gmra.mrb[0].mxu0 %v1276
        %v1394 = vpop.f32.mrb[0].mxu0
        %v1395 = vadd.f32 %v1187, %v1394
        %v1396 = vpop.f32.mrb[0].mxu0
        %v1397 = vadd.f32 %v1191, %v1396
        %v1398 = vpop.f32.mrb[0].mxu0
        %v1399 = vpop.f32.mrb[0].mxu0
        %1400 = vdwg.mxu0
        %1401 = vmatprep.subr.bf16.mxu0 0
        %1402 = vmatpush1.bf16.msra.mxu0 %v1253
        %1403 = vmatprep.subr.bf16.mxu0 0
        %1404 = vmatpush1.bf16.msra.mxu0 %v1260
        %1405 = vmatprep.subr.bf16.mxu0 0
        %1406 = vmatpush1.bf16.msra.mxu0 0
        %1407 = vmatprep.subr.bf16.mxu0 0
        %1408 = vmatpush1.bf16.msra.mxu0 0
        %1409 = vmatprep.subr.bf16.mxu0 0
        %1410 = vmatpush1.bf16.msra.mxu0 0
        %1411 = vmatprep.subr.bf16.mxu0 0
        %1412 = vmatpush1.bf16.msra.mxu0 0
        %1413 = vmatprep.subr.bf16.mxu0 0
        %1414 = vmatpush1.bf16.msra.mxu0 0
        %1415 = vmatprep.subr.bf16.mxu0 0
        %1416 = vmatpush1.bf16.msra.mxu0 0
        %1417 = vmatprep.subr.bf16.mxu0 0
        %1418 = vmatpush1.bf16.msra.mxu0 0
        %1419 = vmatprep.subr.bf16.mxu0 0
        %1420 = vmatpush1.bf16.msra.mxu0 0
        %1421 = vmatprep.subr.bf16.mxu0 0
        %1422 = vmatpush1.bf16.msra.mxu0 0
        %1423 = vmatprep.subr.bf16.mxu0 0
        %1424 = vmatpush1.bf16.msra.mxu0 0
        %1425 = vmatprep.subr.bf16.mxu0 0
        %1426 = vmatpush1.bf16.msra.mxu0 0
        %1427 = vmatprep.subr.bf16.mxu0 0
        %1428 = vmatpush1.bf16.msra.mxu0 0
        %1429 = vmatprep.subr.bf16.mxu0 0
        %1430 = vmatpush1.bf16.msra.mxu0 0
        %1431 = vmatprep.subr.bf16.mxu0 0
        %1432 = vmatpush1.bf16.msra.mxu0 0
        %1433 = vmatprep.mubr.bf16.mxu0 0
        %1434 = vmatmul.mubr.bf16.gmra.mrb[0].mxu0 %v1276
        %v1435 = vpop.f32.mrb[0].mxu0
        %v1436 = vadd.f32 %v1195, %v1435
        %v1437 = vpop.f32.mrb[0].mxu0
        %v1438 = vpop.f32.mrb[0].mxu0
        %v1439 = vpop.f32.mrb[0].mxu0
        %1440 = vdwg.mxu0
        %v1441 = vsub.f32 %v333, %v1313
        %v1442 = vsub.f32 %v334, %v1315
        %v1443 = vsub.f32 %v335, %v1354
        %v1444 = vsub.f32 %v336, %v1356
        %v1445 = vsub.f32 %v337, %v1395
        %v1446 = vsub.f32 %v338, %v1397
        %v1447 = vsub.f32 %v339, %v1436
        %v1448 = vsub.f32 0.0, %v352
        %v1449 = vmul.f32 %v1448, 1.442695
        %v1450 = vpow.pop %v1449
        %v1452 = vlaneseq
        %v1453 = vshrl.u32 %v1452, 7
        %v1454 = vsub.s32 0, %v1453
        %v1455 = vrot.slane %v1450, %v1454
        %v1456 = vlaneseq
        %v1457 = vshrl.u32 %v1456, 7
        %v1458 = vsub.s32 1, %v1457
        %v1459 = vrot.slane %v1450, %v1458
        %v1460 = vlaneseq
        %v1461 = vshrl.u32 %v1460, 7
        %v1462 = vsub.s32 2, %v1461
        %v1463 = vrot.slane %v1450, %v1462
        %v1464 = vlaneseq
        %v1465 = vshrl.u32 %v1464, 7
        %v1466 = vsub.s32 3, %v1465
        %v1467 = vrot.slane %v1450, %v1466
        %v1468 = vlaneseq
        %v1469 = vshrl.u32 %v1468, 7
        %v1470 = vsub.s32 4, %v1469
        %v1471 = vrot.slane %v1450, %v1470
        %v1472 = vlaneseq
        %v1473 = vshrl.u32 %v1472, 7
        %v1474 = vsub.s32 5, %v1473
        %v1475 = vrot.slane %v1450, %v1474
        %v1476 = vlaneseq
        %v1477 = vshrl.u32 %v1476, 7
        %v1478 = vsub.s32 6, %v1477
        %v1479 = vrot.slane %v1450, %v1478
        %v1487 = vmul.f32 %v1441, %v1455
        %v1488 = vmul.f32 %v1442, %v1459
        %v1489 = vmul.f32 %v1443, %v1463
        %v1490 = vmul.f32 %v1444, %v1467
        %v1491 = vmul.f32 %v1445, %v1471
        %v1492 = vmul.f32 %v1446, %v1475
        %v1493 = vmul.f32 %v1447, %v1479
        %v1494 = vmul.f32 %v1487, %v1487
        %v1495 = vmul.f32 %v1488, %v1488
        %v1496 = vmul.f32 %v1489, %v1489
        %v1497 = vmul.f32 %v1490, %v1490
        %v1498 = vmul.f32 %v1491, %v1491
        %v1499 = vmul.f32 %v1492, %v1492
        %v1500 = vmul.f32 %v1493, %v1493
        %v1501 = vadd.f32 %v1494, %v1495
        %v1502 = vadd.f32 %v1501, %v1496
        %v1503 = vadd.f32 %v1502, %v1497
        %v1504 = vadd.f32 %v1503, %v1498
        %v1505 = vadd.f32 %v1504, %v1499
        %v1506 = vsel %vm752, %v1500, 0.0
        %v1507 = vadd.f32 %v1505, %v1506
        %1508 = vadd.xlane.f32.xlu0 %v1507
        %v1509 = vpop.xlane.xlu0 %1508
        %v1510 = vmul.f32 %v1509, -0.5
        %v1512 = vlaneseq
        %v1513 = vshrl.u32 %v1512, 7
        %v1514 = vsub.s32 0, %v1513
        %v1515 = vrot.slane %v352, %v1514
        %v1516 = vlaneseq
        %v1517 = vshrl.u32 %v1516, 7
        %v1518 = vsub.s32 1, %v1517
        %v1519 = vrot.slane %v352, %v1518
        %v1520 = vlaneseq
        %v1521 = vshrl.u32 %v1520, 7
        %v1522 = vsub.s32 2, %v1521
        %v1523 = vrot.slane %v352, %v1522
        %v1524 = vlaneseq
        %v1525 = vshrl.u32 %v1524, 7
        %v1526 = vsub.s32 3, %v1525
        %v1527 = vrot.slane %v352, %v1526
        %v1528 = vlaneseq
        %v1529 = vshrl.u32 %v1528, 7
        %v1530 = vsub.s32 4, %v1529
        %v1531 = vrot.slane %v352, %v1530
        %v1532 = vlaneseq
        %v1533 = vshrl.u32 %v1532, 7
        %v1534 = vsub.s32 5, %v1533
        %v1535 = vrot.slane %v352, %v1534
        %v1536 = vlaneseq
        %v1537 = vshrl.u32 %v1536, 7
        %v1538 = vsub.s32 6, %v1537
        %v1539 = vrot.slane %v352, %v1538
        %vm1547 = vcmask 1040384
        %v1548 = vsel %vm1547, %v1515, 0.0
        %v1549 = vsel %vm1547, %v1519, 0.0
        %v1550 = vadd.f32 %v1548, %v1549
        %v1551 = vsel %vm1547, %v1523, 0.0
        %v1552 = vadd.f32 %v1550, %v1551
        %v1553 = vsel %vm1547, %v1527, 0.0
        %v1554 = vadd.f32 %v1552, %v1553
        %v1555 = vsel %vm1547, %v1531, 0.0
        %v1556 = vadd.f32 %v1554, %v1555
        %v1557 = vsel %vm1547, %v1535, 0.0
        %v1558 = vadd.f32 %v1556, %v1557
        %vm1559 = vcmask 122880
        %v1560 = vsel %vm1559, %v1539, 0.0
        %v1561 = vadd.f32 %v1558, %v1560
        %1562 = vadd.xlane.f32.xlu0 %v1561
        %v1563 = vpop.xlane.xlu0 %1562
        %v1564 = vlaneseq
        %v1565 = vshrl.u32 %v1564, 7
        %v1566 = vsub.s32 0, %v1565
        %v1567 = vrot.slane %v1563, %v1566
        %v1568 = vsub.f32 %v1510, %v1567
        %v1569 = vsub.f32 %v1568, 720.4478
        %v1570 = vmul.f32 %v340, %v340
        %v1571 = vmul.f32 %v1073, %v1073
        %v1572 = vsub.f32 %v1570, %v1571
        %v1573 = vmul.f32 %v1572, 0.5
        %v1574 = vadd.f32 %v1573, %v1067
        %v1575 = vsel %vm1075, %v1574, 0.0
        %1576 = vadd.xlane.f32.xlu0 %v1575
        %v1577 = vpop.xlane.xlu0 %1576
        %v1578 = vadd.f32 %v1569, %v1577
        %vm1579 = vcmask 7168
        %1580 = vst.msk [vmem:[%s331] sm:$0xff] %vm1579, %v1578
        %1581 = vst [vmem:[%s318] sm:$0xff] %v1313
        %1582 = vst [vmem:[%s318 + $0x8] sm:$0xff] %v1315
        %1583 = vst [vmem:[%s318 + $0x10] sm:$0xff] %v1354
        %1584 = vst [vmem:[%s318 + $0x18] sm:$0xff] %v1356
        %1585 = vst [vmem:[%s318 + $0x20] sm:$0xff] %v1395
        %1586 = vst [vmem:[%s318 + $0x28] sm:$0xff] %v1397
        %1587 = vst.msk [vmem:[%s318 + $0x30] sm:$0xff] %vm752, %v1436
        %p1588 = scmp.lt.s32.totalorder %s23, 1
        %s1589 = scalar_select %p1588, %s23, 1
        %s1590 = smul.addr %s1589, 8
        %s1591 = scalar_lea.vmem %s7, %s1590
        %s1592 = sand.u32 %s214, 1
        %s1593 = scalar_lea.sflag [#allocation3], %s1592
        %s1594 = sand.u32 %s214, 1
        %s1595 = smul.addr %s1594, 56
        %s1596 = scalar_lea.vmem [#allocation2], %s1595
        // Predicated region
        $region49: #{tpu_custom_call.1} parent=47 // pred_check
          %p1597 = pneg %p198
        $region50: #{tpu_custom_call.1} parent=47 // pred_check_branch
          %1599 = sbr.rel (%p1597) target = $region52
        $region51: #{tpu_custom_call.1} parent=47 // pred_region
          _
        $region52: #{tpu_custom_call.1} parent=47 // pred_fallthru
          _
        // Predicated region
        $region53: #{tpu_custom_call.1} parent=47 // pred_check
          %p1600 = pneg %p224
        $region54: #{tpu_custom_call.1} parent=47 // pred_check_branch
          %1602 = sbr.rel (%p1600) target = $region56
        $region55: #{tpu_custom_call.1} parent=47 // pred_region
          %s1604 = ssub.s32 896, 896
          %1605 = vsyncadd %s1593, %s1604
          %s1606 = smul.addr %s23, 7
          %s1607 = smul.addr %s1606, 128
          %s1608 = scalar_lea.hbm %s8, %s1607
          %s1610 = sshll.u32 %s1596, 4
          %s1611 = int_to_ptr.vmem [resolvable:$true] %s1610
          %1613 = dma.vmem_to_hbm [thread:$0]  %s1611, 896, %s1608, %s1593
        $region56: #{tpu_custom_call.1} parent=47 // pred_fallthru
          _
      $region48: #{tpu_custom_call.1} parent=5 // pred_fallthru
        _
      %p1614 = scmp.le.s32.totalorder 2, %s18
      // Predicated region
      $region57: #{tpu_custom_call.1} parent=5 // pred_check
        %p1615 = pneg %p1614
      $region58: #{tpu_custom_call.1} parent=5 // pred_check_branch
        %1617 = sbr.rel (%p1615) target = $region60
      $region59: #{tpu_custom_call.1} parent=5 // pred_region
        %s1618 = ssub.s32 %s18, 2
        // Predicated region
        $region61: #{tpu_custom_call.1} parent=59 // pred_check
          %p1619 = pneg %p204
        $region62: #{tpu_custom_call.1} parent=59 // pred_check_branch
          %1621 = sbr.rel (%p1619) target = $region64
        $region63: #{tpu_custom_call.1} parent=59 // pred_region
          %p1622 = scmp.lt.s32.totalorder %s24, 1
          %s1623 = scalar_select %p1622, %s24, 1
          %s1624 = smul.addr %s1623, 8
          %s1625 = scalar_lea.vmem %s7, %s1624
        $region64: #{tpu_custom_call.1} parent=59 // pred_fallthru
          _
        // Predicated region
        $region65: #{tpu_custom_call.1} parent=59 // pred_check
          %p1626 = pneg %p230
        $region66: #{tpu_custom_call.1} parent=59 // pred_check_branch
          %1628 = sbr.rel (%p1626) target = $region68
        $region67: #{tpu_custom_call.1} parent=59 // pred_region
          %s1629 = sand.u32 %s215, 1
          %s1630 = scalar_lea.sflag [#allocation3], %s1629
          %s1631 = sand.u32 %s215, 1
          %s1632 = smul.addr %s1631, 56
          %s1633 = scalar_lea.vmem [#allocation2], %s1632
          %1634 = dma.done %s1630, 896
        $region68: #{tpu_custom_call.1} parent=59 // pred_fallthru
          _
      $region60: #{tpu_custom_call.1} parent=5 // pred_fallthru
        _
    $region6: #{tpu_custom_call.1} parent=1 // loop_footer
      %s22 = sadd.s32 1, %s18
    $region7: #{tpu_custom_call.1} parent=1 // loop_footer_branch
      %17 = sbr.rel target = $region3
    $region8: #{tpu_custom_call.1} parent=1 // loop_exit
      _
    %1635 = vsyncpa [#allocation3], 1
    %s1636 = scalar_lea.sflag [#allocation3], 1
    %1637 = vsyncpa %s1636, 1

</llo_original>
